<compile_context>
chip_gen: v7x
topology: tpu7x:2x2x1
jax: 0.10.0
libtpu: 0.0.40
codegen_flags: <defaults>
</compile_context>

<pallas_src>
import jax
import jax.numpy as jnp
from jax.experimental import pallas as pl
from jax.experimental.pallas import tpu as pltpu

ENC = (10, 20, 10)      # encoder_size in the PyTorch module
DEC = (10, 20, 10)      # decoder_size in the PyTorch module
LANE = 128              # TPU lane width; all activations carried as [B, 128]
GATES = 4               # LSTM gate order: i, f, g, o (PyTorch convention)
BIAS_LANE = LANE - 1    # constant-1.0 lane on cond rows -> folds the LSTM bias

# Square MLP weight-slab indices ([6, 128, 128] bf16).
WE1, WE2, WE3, WD2, WD3, WD4 = range(6)
# Bias slab indices ([7, B, 128] f32, pre-broadcast over batch).
BE1, BE2, BE3, BD1, BD2, BD3, BD4 = range(7)


# ---------------------------------------------------------------------------
# Kernel
# ---------------------------------------------------------------------------
def cvae_kernel(data_ref, w_sq_ref, w_heads_ref, w_dec1_ref, w_lstm_ref,
                b_sq_ref, b_heads_ref, out_ref, gin_ref):
    f32, bf16 = jnp.float32, jnp.bfloat16
    B = out_ref.shape[1]
    T = data_ref.shape[0] // B - 2          # data = [x | eps | cond(T*B)]

    def dense(v, wk, bk, act=None):
        y = (jnp.dot(v.astype(bf16), w_sq_ref[wk],
                     preferred_element_type=f32) + b_sq_ref[bk])
        return act(y) if act is not None else y

    x = data_ref[0:B, :]                    # [B, 128], zero-padded lanes
    eps = data_ref[B:2 * B, :]              # [B, 128]

    # ---- encoder MLP + fused mu/log_std heads (one 256-wide matmul) ----
    h = dense(x, WE1, BE1, jnp.tanh)
    h = dense(h, WE2, BE2, jnp.tanh)
    h = dense(h, WE3, BE3, jnp.tanh)
    heads = (jnp.dot(h.astype(bf16), w_heads_ref[...],
                     preferred_element_type=f32) + b_heads_ref[...])  # [B,256]
    mu = heads[:, :LANE]
    log_std = heads[:, LANE:]
    out_ref[1] = mu                         # lane-dense [B, 128] store
    out_ref[2] = log_std

    # ---- reparametrize: z = mu + eps * exp(log_std) ----
    z = mu + eps * jnp.exp(log_std)

    # ---- LSTM layer 0 over the condition sequence (time-major) ----
    # Hoisted input projection: all T steps in ONE bf16 matmul; the combined
    # LSTM bias is folded in via the constant-1.0 lane of the cond rows.
    cond = data_ref[2 * B:(2 + T) * B, :]                      # [T*B, 128]
    gin_ref[...] = jnp.dot(cond.astype(bf16), w_lstm_ref[0],
                           preferred_element_type=f32)         # [T*B, 4*128]

    # Hoisted recurrent RHS: read the [128, 512] bf16 W_hh once, reuse it
    # across all T unrolled steps instead of re-streaming it per step.
    # TODO(synk): pltpu.matmul_push_rhs/acc_lhs/pop could pin W_hh in the MXU
    # weight registers across steps; plain hoist kept for lowering safety.
    w_hh = w_lstm_ref[1]

    hh = jnp.zeros((B, LANE), f32)          # hidden; padded lanes stay 0
    cc = jnp.zeros((B, LANE), f32)          # cell;   padded lanes stay 0
    for t in range(T):                      # static T -> fully unrolled
        if t == 0:                          # h_0 == 0: skip the matmul
            g = gin_ref[0:B, :]
        else:
            g = gin_ref[t * B:(t + 1) * B, :] + jnp.dot(
                hh.astype(bf16), w_hh, preferred_element_type=f32)
        # Each gate is its own 128-lane block: whole-vreg slices, no rotates.
        i = jax.nn.sigmoid(g[:, 0 * LANE:1 * LANE])
        f = jax.nn.sigmoid(g[:, 1 * LANE:2 * LANE])
        gg = jnp.tanh(g[:, 2 * LANE:3 * LANE])
        o = jax.nn.sigmoid(g[:, 3 * LANE:4 * LANE])
        cc = (f * cc + i * gg) if t > 0 else (i * gg)
        hh = o * jnp.tanh(cc)
    con = jnp.maximum(hh, 0.0)              # F.relu(h_n)[0]

    # ---- decoder: fused first layer  [z | con] @ [W_z ; W_c]  ----
    zc = jnp.concatenate([z, con], axis=-1).astype(bf16)       # [B, 256]
    d = jnp.tanh(jnp.dot(zc, w_dec1_ref[...], preferred_element_type=f32)
                 + b_sq_ref[BD1])
    d = dense(d, WD2, BD2, jnp.tanh)
    d = dense(d, WD3, BD3, jnp.tanh)
    out_ref[0] = dense(d, WD4, BD4)


# ---------------------------------------------------------------------------
# Parameters: raw (PyTorch-like) init + packing into lane-padded slabs
# ---------------------------------------------------------------------------
def _linear(key, fan_in, fan_out):
    k = 1.0 / float(fan_in) ** 0.5
    kw, kb = jax.random.split(key)
    w = jax.random.uniform(kw, (fan_in, fan_out), jnp.float32, -k, k)
    b = jax.random.uniform(kb, (1, fan_out), jnp.float32, -k, k)
    return w, b


def init_params(key, input_size, latent_size):
    """Raw (unpadded) params; Linear weights stored [in, out]."""
    keys = jax.random.split(key, 10)
    p = {}
    p['ew1'], p['eb1'] = _linear(keys[0], input_size, ENC[0])
    p['ew2'], p['eb2'] = _linear(keys[1], ENC[0], ENC[1])
    p['ew3'], p['eb3'] = _linear(keys[2], ENC[1], ENC[2])
    p['mw'], p['mb'] = _linear(keys[3], ENC[2], latent_size)
    p['sw'], p['sb'] = _linear(keys[4], ENC[2], latent_size)
    # LSTM layer 0 only — forward() uses F.relu(h_n)[0]; layers 1/2 are dead.
    L = latent_size
    k = 1.0 / float(L) ** 0.5
    k1, k2, k3, k4 = jax.random.split(keys[5], 4)
    p['wih0'] = jax.random.uniform(k1, (input_size, 4 * L), jnp.float32, -k, k)
    p['whh0'] = jax.random.uniform(k2, (L, 4 * L), jnp.float32, -k, k)
    b_ih = jax.random.uniform(k3, (1, 4 * L), jnp.float32, -k, k)
    b_hh = jax.random.uniform(k4, (1, 4 * L), jnp.float32, -k, k)
    p['lb0'] = b_ih + b_hh          # combined bias: same math as PyTorch
    # decoder; first layer split into z-half / con-half of the weight matrix
    dw1, p['db1'] = _linear(keys[6], 2 * L, DEC[0])
    p['dwz'], p['dwc'] = dw1[:L, :], dw1[L:, :]
    p['dw2'], p['db2'] = _linear(keys[7], DEC[0], DEC[1])
    p['dw3'], p['db3'] = _linear(keys[8], DEC[1], DEC[2])
    p['dw4'], p['db4'] = _linear(keys[9], DEC[2], input_size)
    return p


def _pad2(a, rows, cols):
    return jnp.zeros((rows, cols), jnp.float32).at[:a.shape[0], :a.shape[1]].set(a)


def _gate_pad(a, L):
    """[rows, 4L] -> [rows, 4*128]: gate g lives in lanes [g*128, g*128+L)."""
    out = jnp.zeros((a.shape[0], GATES * LANE), jnp.float32)
    for g in range(GATES):
        out = out.at[:, g * LANE:g * LANE + L].set(a[:, g * L:(g + 1) * L])
    return out


def pack_params(p, latent_size, batch_size):
    L, B = latent_size, batch_size
    bf16 = jnp.bfloat16
    # Square MLP weights -> one bf16 [6,128,128] slab.
    w_sq = jnp.stack([_pad2(p[n], LANE, LANE)
                      for n in ('ew1', 'ew2', 'ew3', 'dw2', 'dw3', 'dw4')]
                     ).astype(bf16)
    # Fused heads [128, 256]: mu weights in lanes [0:128), log_std in [128:256).
    w_heads = jnp.concatenate([_pad2(p['mw'], LANE, LANE),
                               _pad2(p['sw'], LANE, LANE)], axis=1).astype(bf16)
    # Fused decoder-1 [256, 128]: rows [0:128) multiply z, [128:256) multiply con.
    w_dec1 = jnp.concatenate([_pad2(p['dwz'], LANE, LANE),
                              _pad2(p['dwc'], LANE, LANE)], axis=0).astype(bf16)
    # LSTM: gate-aligned; combined bias folded into row BIAS_LANE of W_ih
    # (pairs with the constant-1.0 lane written on the cond rows).
    w_ih = _pad2(_gate_pad(p['wih0'], L), LANE, GATES * LANE)
    w_ih = w_ih.at[BIAS_LANE, :].set(_gate_pad(p['lb0'], L)[0])
    w_hh = _pad2(_gate_pad(p['whh0'], L), LANE, GATES * LANE)
    w_lstm = jnp.stack([w_ih, w_hh]).astype(bf16)               # [2,128,512]
    # Biases, pre-broadcast over the batch -> plain VPU adds in the kernel.
    b_sq = jnp.stack([jnp.broadcast_to(_pad2(p[n], 1, LANE), (B, LANE))
                      for n in ('eb1', 'eb2', 'eb3', 'db1', 'db2', 'db3', 'db4')])
    b_heads = jnp.broadcast_to(
        jnp.concatenate([_pad2(p['mb'], 1, LANE), _pad2(p['sb'], 1, LANE)],
                        axis=1), (B, 2 * LANE))
    return (w_sq, w_heads, w_dec1, w_lstm,
            jnp.asarray(b_sq, jnp.float32), jnp.asarray(b_heads, jnp.float32))


# ---------------------------------------------------------------------------
# Wrapper
# ---------------------------------------------------------------------------
def lstm_cvae_forward(x, condition, eps, packed):
    w_sq, w_heads, w_dec1, w_lstm, b_sq, b_heads = packed
    B, I = x.shape
    L = eps.shape[1]
    T = condition.shape[1]
    assert I < LANE and L <= LANE and b_sq.shape[1] == B

    def lane_pad(a, bias_lane=False):
        a = a.astype(jnp.float32)
        out = jnp.pad(a, ((0, 0), (0, LANE - a.shape[-1])))
        if bias_lane:
            out = out.at[:, BIAS_LANE].set(1.0)   # drives the folded LSTM bias
        return out

    # Pack x, eps and the (time-major, flattened) condition into one data slab.
    cond_tm = jnp.transpose(condition.astype(jnp.float32), (1, 0, 2))   # [T,B,I]
    data = jnp.concatenate(
        [lane_pad(x), lane_pad(eps),
         lane_pad(cond_tm.reshape(T * B, I), bias_lane=True)], axis=0)

    vmem = pl.BlockSpec(memory_space=pltpu.MemorySpace.VMEM)
    out = pl.pallas_call(
        cvae_kernel,
        out_shape=jax.ShapeDtypeStruct((3, B, LANE), jnp.float32),
        in_specs=[vmem] * 7,
        out_specs=vmem,
        scratch_shapes=[pltpu.VMEM((T * B, GATES * LANE), jnp.float32)],
    )(data, w_sq, w_heads, w_dec1, w_lstm, b_sq, b_heads)
    # TODO(synk): at real batch sizes (B >= 16) add a batch grid axis with
    # dimension_semantics=("parallel",) (constant index_maps on the weight
    # slabs) so v7x's second TensorCore is used and the data slab pipelines;
    # at B=8 the whole problem is a single (8,128) tile, so it stays grid-less.
    recon = out[0, :, :I]
    mu = out[1, :, :L]
    log_std = out[2, :, :L]
    return recon, mu, log_std


# ---------------------------------------------------------------------------
# Plain-JAX reference (same semantics) for validation
# ---------------------------------------------------------------------------
def reference_forward(p, x, condition, eps):
    h = jnp.tanh(x @ p['ew1'] + p['eb1'])
    h = jnp.tanh(h @ p['ew2'] + p['eb2'])
    h = jnp.tanh(h @ p['ew3'] + p['eb3'])
    mu = h @ p['mw'] + p['mb']
    log_std = h @ p['sw'] + p['sb']
    z = mu + eps * jnp.exp(log_std)
    B, T, _ = condition.shape
    L = mu.shape[1]
    hh = jnp.zeros((B, L), jnp.float32)
    cc = jnp.zeros((B, L), jnp.float32)
    for t in range(T):
        g = condition[:, t, :] @ p['wih0'] + hh @ p['whh0'] + p['lb0']
        i = jax.nn.sigmoid(g[:, 0 * L:1 * L])
        f = jax.nn.sigmoid(g[:, 1 * L:2 * L])
        gg = jnp.tanh(g[:, 2 * L:3 * L])
        o = jax.nn.sigmoid(g[:, 3 * L:4 * L])
        cc = f * cc + i * gg
        hh = o * jnp.tanh(cc)
    con = jnp.maximum(hh, 0.0)
    d = jnp.tanh(z @ p['dwz'] + con @ p['dwc'] + p['db1'])
    d = jnp.tanh(d @ p['dw2'] + p['db2'])
    d = jnp.tanh(d @ p['dw3'] + p['db3'])
    recon = d @ p['dw4'] + p['db4']
    return recon, mu, log_std


if __name__ == "__main__":
    input_size = 8
    latent_size = 8
    B = 8
    T = latent_size          # condition_length == latent_size in the module

    key = jax.random.PRNGKey(0)
    kx, kc, ke, kp = jax.random.split(key, 4)
    x = jax.random.normal(kx, (B, input_size), jnp.float32)
    condition = jax.random.normal(kc, (B, T, input_size), jnp.float32)
    # TODO(synk): torch.randn_like inside reparametrize has no in-kernel
    # equivalent tied to torch RNG; the noise is drawn here and fed in.
    eps = jax.random.normal(ke, (B, latent_size), jnp.float32)

    raw = init_params(kp, input_size, latent_size)
    packed = pack_params(raw, latent_size, B)

    recon, mu, log_std = lstm_cvae_forward(x, condition, eps, packed)
    jax.block_until_ready((recon, mu, log_std))

    assert recon.shape == (B, input_size)
    assert mu.shape == (B, latent_size)
    assert log_std.shape == (B, latent_size)
    assert jnp.all(jnp.isfinite(recon)) and jnp.all(jnp.isfinite(mu))

    r_recon, r_mu, r_logstd = reference_forward(raw, x, condition, eps)
    # Tolerance covers bf16 weight/activation rounding (f32 accumulation kept).
    assert jnp.allclose(mu, r_mu, rtol=3e-2, atol=3e-2)
    assert jnp.allclose(log_std, r_logstd, rtol=3e-2, atol=3e-2)
    assert jnp.allclose(recon, r_recon, rtol=3e-2, atol=3e-2)

    print("KERNEL_OK")
</pallas_src>

<mosaic_0001>
module attributes {stable_mosaic.version = 11 : i64} {
  func.func @cvae_kernel(%arg0: memref<80x128xf32, #tpu.memory_space<vmem>>, %arg1: memref<6x128x128xbf16, #tpu.memory_space<vmem>>, %arg2: memref<128x256xbf16, #tpu.memory_space<vmem>>, %arg3: memref<256x128xbf16, #tpu.memory_space<vmem>>, %arg4: memref<2x128x512xbf16, #tpu.memory_space<vmem>>, %arg5: memref<7x8x128xf32, #tpu.memory_space<vmem>>, %arg6: memref<8x256xf32, #tpu.memory_space<vmem>>, %arg7: memref<3x8x128xf32, #tpu.memory_space<vmem>>, %arg8: memref<64x512xf32, #tpu.memory_space<vmem>>) attributes {dimension_semantics = [], scalar_prefetch = 0 : i64, scratch_operands = 1 : i64, tpu.core_type = #tpu.core_type<tc>} {
    %c0 = arith.constant 0 : index
    %c0_0 = arith.constant 0 : index
    %0 = vector.load %arg0[%c0, %c0_0] : memref<80x128xf32, #tpu.memory_space<vmem>>, vector<8x128xf32>
    %c8 = arith.constant 8 : index
    %c0_1 = arith.constant 0 : index
    %1 = vector.load %arg0[%c8, %c0_1] : memref<80x128xf32, #tpu.memory_space<vmem>>, vector<8x128xf32>
    %2 = arith.truncf %0 : vector<8x128xf32> to vector<8x128xbf16>
    %c0_2 = arith.constant 0 : index
    %c0_3 = arith.constant 0 : index
    %c0_4 = arith.constant 0 : index
    %3 = vector.load %arg1[%c0_2, %c0_3, %c0_4] : memref<6x128x128xbf16, #tpu.memory_space<vmem>>, vector<1x128x128xbf16>
    %4 = vector.shape_cast %3 : vector<1x128x128xbf16> to vector<128x128xbf16>
    %cst = arith.constant dense<0.000000e+00> : vector<8x128xf32>
    %5 = tpu.matmul %2, %4, %cst {dimension_numbers = #tpu.dot_dimension_numbers<[1], [0], [0], [1], [0, 0, 1, 1], [], []>} : vector<8x128xbf16>, vector<128x128xbf16>, vector<8x128xf32> -> vector<8x128xf32>
    %c0_5 = arith.constant 0 : index
    %c0_6 = arith.constant 0 : index
    %c0_7 = arith.constant 0 : index
    %6 = vector.load %arg5[%c0_5, %c0_6, %c0_7] : memref<7x8x128xf32, #tpu.memory_space<vmem>>, vector<1x8x128xf32>
    %7 = vector.shape_cast %6 : vector<1x8x128xf32> to vector<8x128xf32>
    %8 = arith.addf %5, %7 : vector<8x128xf32>
    %9 = math.tanh %8 : vector<8x128xf32>
    %10 = arith.truncf %9 : vector<8x128xf32> to vector<8x128xbf16>
    %c1 = arith.constant 1 : index
    %c0_8 = arith.constant 0 : index
    %c0_9 = arith.constant 0 : index
    %11 = vector.load %arg1[%c1, %c0_8, %c0_9] : memref<6x128x128xbf16, #tpu.memory_space<vmem>>, vector<1x128x128xbf16>
    %12 = vector.shape_cast %11 : vector<1x128x128xbf16> to vector<128x128xbf16>
    %cst_10 = arith.constant dense<0.000000e+00> : vector<8x128xf32>
    %13 = tpu.matmul %10, %12, %cst_10 {dimension_numbers = #tpu.dot_dimension_numbers<[1], [0], [0], [1], [0, 0, 1, 1], [], []>} : vector<8x128xbf16>, vector<128x128xbf16>, vector<8x128xf32> -> vector<8x128xf32>
    %c1_11 = arith.constant 1 : index
    %c0_12 = arith.constant 0 : index
    %c0_13 = arith.constant 0 : index
    %14 = vector.load %arg5[%c1_11, %c0_12, %c0_13] : memref<7x8x128xf32, #tpu.memory_space<vmem>>, vector<1x8x128xf32>
    %15 = vector.shape_cast %14 : vector<1x8x128xf32> to vector<8x128xf32>
    %16 = arith.addf %13, %15 : vector<8x128xf32>
    %17 = math.tanh %16 : vector<8x128xf32>
    %18 = arith.truncf %17 : vector<8x128xf32> to vector<8x128xbf16>
    %c2 = arith.constant 2 : index
    %c0_14 = arith.constant 0 : index
    %c0_15 = arith.constant 0 : index
    %19 = vector.load %arg1[%c2, %c0_14, %c0_15] : memref<6x128x128xbf16, #tpu.memory_space<vmem>>, vector<1x128x128xbf16>
    %20 = vector.shape_cast %19 : vector<1x128x128xbf16> to vector<128x128xbf16>
    %cst_16 = arith.constant dense<0.000000e+00> : vector<8x128xf32>
    %21 = tpu.matmul %18, %20, %cst_16 {dimension_numbers = #tpu.dot_dimension_numbers<[1], [0], [0], [1], [0, 0, 1, 1], [], []>} : vector<8x128xbf16>, vector<128x128xbf16>, vector<8x128xf32> -> vector<8x128xf32>
    %c2_17 = arith.constant 2 : index
    %c0_18 = arith.constant 0 : index
    %c0_19 = arith.constant 0 : index
    %22 = vector.load %arg5[%c2_17, %c0_18, %c0_19] : memref<7x8x128xf32, #tpu.memory_space<vmem>>, vector<1x8x128xf32>
    %23 = vector.shape_cast %22 : vector<1x8x128xf32> to vector<8x128xf32>
    %24 = arith.addf %21, %23 : vector<8x128xf32>
    %25 = math.tanh %24 : vector<8x128xf32>
    %26 = arith.truncf %25 : vector<8x128xf32> to vector<8x128xbf16>
    %c0_20 = arith.constant 0 : index
    %c0_21 = arith.constant 0 : index
    %27 = vector.load %arg2[%c0_20, %c0_21] : memref<128x256xbf16, #tpu.memory_space<vmem>>, vector<128x256xbf16>
    %cst_22 = arith.constant dense<0.000000e+00> : vector<8x256xf32>
    %28 = tpu.matmul %26, %27, %cst_22 {dimension_numbers = #tpu.dot_dimension_numbers<[1], [0], [0], [1], [0, 0, 1, 1], [], []>} : vector<8x128xbf16>, vector<128x256xbf16>, vector<8x256xf32> -> vector<8x256xf32>
    %c0_23 = arith.constant 0 : index
    %c0_24 = arith.constant 0 : index
    %29 = vector.load %arg6[%c0_23, %c0_24] : memref<8x256xf32, #tpu.memory_space<vmem>>, vector<8x256xf32>
    %30 = arith.addf %28, %29 : vector<8x256xf32>
    %31 = vector.extract_strided_slice %30 {offsets = [0, 0], sizes = [8, 128], strides = [1, 1]} : vector<8x256xf32> to vector<8x128xf32>
    %32 = vector.extract_strided_slice %30 {offsets = [0, 128], sizes = [8, 128], strides = [1, 1]} : vector<8x256xf32> to vector<8x128xf32>
    %c1_25 = arith.constant 1 : index
    %c0_26 = arith.constant 0 : index
    %c0_27 = arith.constant 0 : index
    %33 = vector.load %arg7[%c1_25, %c0_26, %c0_27] : memref<3x8x128xf32, #tpu.memory_space<vmem>>, vector<1x8x128xf32>
    %34 = vector.shape_cast %33 : vector<1x8x128xf32> to vector<8x128xf32>
    %35 = vector.shape_cast %31 : vector<8x128xf32> to vector<1x8x128xf32>
    tpu.vector_store %arg7[%c1_25, %c0_26, %c0_27], %35 {strides = array<i32>} : memref<3x8x128xf32, #tpu.memory_space<vmem>>, vector<1x8x128xf32>,
    %c2_28 = arith.constant 2 : index
    %c0_29 = arith.constant 0 : index
    %c0_30 = arith.constant 0 : index
    %36 = vector.load %arg7[%c2_28, %c0_29, %c0_30] : memref<3x8x128xf32, #tpu.memory_space<vmem>>, vector<1x8x128xf32>
    %37 = vector.shape_cast %36 : vector<1x8x128xf32> to vector<8x128xf32>
    %38 = vector.shape_cast %32 : vector<8x128xf32> to vector<1x8x128xf32>
    tpu.vector_store %arg7[%c2_28, %c0_29, %c0_30], %38 {strides = array<i32>} : memref<3x8x128xf32, #tpu.memory_space<vmem>>, vector<1x8x128xf32>,
    %39 = math.exp %32 : vector<8x128xf32>
    %40 = arith.mulf %1, %39 : vector<8x128xf32>
    %41 = arith.addf %31, %40 : vector<8x128xf32>
    %c16 = arith.constant 16 : index
    %c0_31 = arith.constant 0 : index
    %42 = vector.load %arg0[%c16, %c0_31] : memref<80x128xf32, #tpu.memory_space<vmem>>, vector<64x128xf32>
    %43 = arith.truncf %42 : vector<64x128xf32> to vector<64x128xbf16>
    %c0_32 = arith.constant 0 : index
    %c0_33 = arith.constant 0 : index
    %c0_34 = arith.constant 0 : index
    %44 = vector.load %arg4[%c0_32, %c0_33, %c0_34] : memref<2x128x512xbf16, #tpu.memory_space<vmem>>, vector<1x128x512xbf16>
    %45 = vector.shape_cast %44 : vector<1x128x512xbf16> to vector<128x512xbf16>
    %cst_35 = arith.constant dense<0.000000e+00> : vector<64x512xf32>
    %46 = tpu.matmul %43, %45, %cst_35 {dimension_numbers = #tpu.dot_dimension_numbers<[1], [0], [0], [1], [0, 0, 1, 1], [], []>} : vector<64x128xbf16>, vector<128x512xbf16>, vector<64x512xf32> -> vector<64x512xf32>
    %c0_36 = arith.constant 0 : index
    %c0_37 = arith.constant 0 : index
    %47 = vector.load %arg8[%c0_36, %c0_37] : memref<64x512xf32, #tpu.memory_space<vmem>>, vector<64x512xf32>
    tpu.vector_store %arg8[%c0_36, %c0_37], %46 {strides = array<i32>} : memref<64x512xf32, #tpu.memory_space<vmem>>, vector<64x512xf32>,
    %c1_38 = arith.constant 1 : index
    %c0_39 = arith.constant 0 : index
    %c0_40 = arith.constant 0 : index
    %48 = vector.load %arg4[%c1_38, %c0_39, %c0_40] : memref<2x128x512xbf16, #tpu.memory_space<vmem>>, vector<1x128x512xbf16>
    %49 = vector.shape_cast %48 : vector<1x128x512xbf16> to vector<128x512xbf16>
    %c0_41 = arith.constant 0 : index
    %c0_42 = arith.constant 0 : index
    %50 = vector.load %arg8[%c0_41, %c0_42] : memref<64x512xf32, #tpu.memory_space<vmem>>, vector<8x512xf32>
    %51 = vector.extract_strided_slice %50 {offsets = [0, 0], sizes = [8, 128], strides = [1, 1]} : vector<8x512xf32> to vector<8x128xf32>
    %52 = arith.negf %51 : vector<8x128xf32>
    %53 = math.exp %52 : vector<8x128xf32>
    %cst_43 = arith.constant 1.000000e+00 : f32
    %54 = vector.broadcast %cst_43 : f32 to vector<8x128xf32>
    %55 = arith.addf %54, %53 : vector<8x128xf32>
    %56 = arith.divf %54, %55 : vector<8x128xf32>
    %57 = vector.extract_strided_slice %50 {offsets = [0, 256], sizes = [8, 128], strides = [1, 1]} : vector<8x512xf32> to vector<8x128xf32>
    %58 = math.tanh %57 : vector<8x128xf32>
    %59 = vector.extract_strided_slice %50 {offsets = [0, 384], sizes = [8, 128], strides = [1, 1]} : vector<8x512xf32> to vector<8x128xf32>
    %60 = arith.negf %59 : vector<8x128xf32>
    %61 = math.exp %60 : vector<8x128xf32>
    %cst_44 = arith.constant 1.000000e+00 : f32
    %62 = vector.broadcast %cst_44 : f32 to vector<8x128xf32>
    %63 = arith.addf %62, %61 : vector<8x128xf32>
    %64 = arith.divf %62, %63 : vector<8x128xf32>
    %65 = arith.mulf %56, %58 : vector<8x128xf32>
    %66 = math.tanh %65 : vector<8x128xf32>
    %67 = arith.mulf %64, %66 : vector<8x128xf32>
    %c8_45 = arith.constant 8 : index
    %c0_46 = arith.constant 0 : index
    %68 = vector.load %arg8[%c8_45, %c0_46] : memref<64x512xf32, #tpu.memory_space<vmem>>, vector<8x512xf32>
    %69 = arith.truncf %67 : vector<8x128xf32> to vector<8x128xbf16>
    %cst_47 = arith.constant dense<0.000000e+00> : vector<8x512xf32>
    %70 = tpu.matmul %69, %49, %cst_47 {dimension_numbers = #tpu.dot_dimension_numbers<[1], [0], [0], [1], [0, 0, 1, 1], [], []>} : vector<8x128xbf16>, vector<128x512xbf16>, vector<8x512xf32> -> vector<8x512xf32>
    %71 = arith.addf %68, %70 : vector<8x512xf32>
    %72 = vector.extract_strided_slice %71 {offsets = [0, 0], sizes = [8, 128], strides = [1, 1]} : vector<8x512xf32> to vector<8x128xf32>
    %73 = arith.negf %72 : vector<8x128xf32>
    %74 = math.exp %73 : vector<8x128xf32>
    %cst_48 = arith.constant 1.000000e+00 : f32
    %75 = vector.broadcast %cst_48 : f32 to vector<8x128xf32>
    %76 = arith.addf %75, %74 : vector<8x128xf32>
    %77 = arith.divf %75, %76 : vector<8x128xf32>
    %78 = vector.extract_strided_slice %71 {offsets = [0, 128], sizes = [8, 128], strides = [1, 1]} : vector<8x512xf32> to vector<8x128xf32>
    %79 = arith.negf %78 : vector<8x128xf32>
    %80 = math.exp %79 : vector<8x128xf32>
    %cst_49 = arith.constant 1.000000e+00 : f32
    %81 = vector.broadcast %cst_49 : f32 to vector<8x128xf32>
    %82 = arith.addf %81, %80 : vector<8x128xf32>
    %83 = arith.divf %81, %82 : vector<8x128xf32>
    %84 = vector.extract_strided_slice %71 {offsets = [0, 256], sizes = [8, 128], strides = [1, 1]} : vector<8x512xf32> to vector<8x128xf32>
    %85 = math.tanh %84 : vector<8x128xf32>
    %86 = vector.extract_strided_slice %71 {offsets = [0, 384], sizes = [8, 128], strides = [1, 1]} : vector<8x512xf32> to vector<8x128xf32>
    %87 = arith.negf %86 : vector<8x128xf32>
    %88 = math.exp %87 : vector<8x128xf32>
    %cst_50 = arith.constant 1.000000e+00 : f32
    %89 = vector.broadcast %cst_50 : f32 to vector<8x128xf32>
    %90 = arith.addf %89, %88 : vector<8x128xf32>
    %91 = arith.divf %89, %90 : vector<8x128xf32>
    %92 = arith.mulf %83, %65 : vector<8x128xf32>
    %93 = arith.mulf %77, %85 : vector<8x128xf32>
    %94 = arith.addf %92, %93 : vector<8x128xf32>
    %95 = math.tanh %94 : vector<8x128xf32>
    %96 = arith.mulf %91, %95 : vector<8x128xf32>
    %c16_51 = arith.constant 16 : index
    %c0_52 = arith.constant 0 : index
    %97 = vector.load %arg8[%c16_51, %c0_52] : memref<64x512xf32, #tpu.memory_space<vmem>>, vector<8x512xf32>
    %98 = arith.truncf %96 : vector<8x128xf32> to vector<8x128xbf16>
    %cst_53 = arith.constant dense<0.000000e+00> : vector<8x512xf32>
    %99 = tpu.matmul %98, %49, %cst_53 {dimension_numbers = #tpu.dot_dimension_numbers<[1], [0], [0], [1], [0, 0, 1, 1], [], []>} : vector<8x128xbf16>, vector<128x512xbf16>, vector<8x512xf32> -> vector<8x512xf32>
    %100 = arith.addf %97, %99 : vector<8x512xf32>
    %101 = vector.extract_strided_slice %100 {offsets = [0, 0], sizes = [8, 128], strides = [1, 1]} : vector<8x512xf32> to vector<8x128xf32>
    %102 = arith.negf %101 : vector<8x128xf32>
    %103 = math.exp %102 : vector<8x128xf32>
    %cst_54 = arith.constant 1.000000e+00 : f32
    %104 = vector.broadcast %cst_54 : f32 to vector<8x128xf32>
    %105 = arith.addf %104, %103 : vector<8x128xf32>
    %106 = arith.divf %104, %105 : vector<8x128xf32>
    %107 = vector.extract_strided_slice %100 {offsets = [0, 128], sizes = [8, 128], strides = [1, 1]} : vector<8x512xf32> to vector<8x128xf32>
    %108 = arith.negf %107 : vector<8x128xf32>
    %109 = math.exp %108 : vector<8x128xf32>
    %cst_55 = arith.constant 1.000000e+00 : f32
    %110 = vector.broadcast %cst_55 : f32 to vector<8x128xf32>
    %111 = arith.addf %110, %109 : vector<8x128xf32>
    %112 = arith.divf %110, %111 : vector<8x128xf32>
    %113 = vector.extract_strided_slice %100 {offsets = [0, 256], sizes = [8, 128], strides = [1, 1]} : vector<8x512xf32> to vector<8x128xf32>
    %114 = math.tanh %113 : vector<8x128xf32>
    %115 = vector.extract_strided_slice %100 {offsets = [0, 384], sizes = [8, 128], strides = [1, 1]} : vector<8x512xf32> to vector<8x128xf32>
    %116 = arith.negf %115 : vector<8x128xf32>
    %117 = math.exp %116 : vector<8x128xf32>
    %cst_56 = arith.constant 1.000000e+00 : f32
    %118 = vector.broadcast %cst_56 : f32 to vector<8x128xf32>
    %119 = arith.addf %118, %117 : vector<8x128xf32>
    %120 = arith.divf %118, %119 : vector<8x128xf32>
    %121 = arith.mulf %112, %94 : vector<8x128xf32>
    %122 = arith.mulf %106, %114 : vector<8x128xf32>
    %123 = arith.addf %121, %122 : vector<8x128xf32>
    %124 = math.tanh %123 : vector<8x128xf32>
    %125 = arith.mulf %120, %124 : vector<8x128xf32>
    %c24 = arith.constant 24 : index
    %c0_57 = arith.constant 0 : index
    %126 = vector.load %arg8[%c24, %c0_57] : memref<64x512xf32, #tpu.memory_space<vmem>>, vector<8x512xf32>
    %127 = arith.truncf %125 : vector<8x128xf32> to vector<8x128xbf16>
    %cst_58 = arith.constant dense<0.000000e+00> : vector<8x512xf32>
    %128 = tpu.matmul %127, %49, %cst_58 {dimension_numbers = #tpu.dot_dimension_numbers<[1], [0], [0], [1], [0, 0, 1, 1], [], []>} : vector<8x128xbf16>, vector<128x512xbf16>, vector<8x512xf32> -> vector<8x512xf32>
    %129 = arith.addf %126, %128 : vector<8x512xf32>
    %130 = vector.extract_strided_slice %129 {offsets = [0, 0], sizes = [8, 128], strides = [1, 1]} : vector<8x512xf32> to vector<8x128xf32>
    %131 = arith.negf %130 : vector<8x128xf32>
    %132 = math.exp %131 : vector<8x128xf32>
    %cst_59 = arith.constant 1.000000e+00 : f32
    %133 = vector.broadcast %cst_59 : f32 to vector<8x128xf32>
    %134 = arith.addf %133, %132 : vector<8x128xf32>
    %135 = arith.divf %133, %134 : vector<8x128xf32>
    %136 = vector.extract_strided_slice %129 {offsets = [0, 128], sizes = [8, 128], strides = [1, 1]} : vector<8x512xf32> to vector<8x128xf32>
    %137 = arith.negf %136 : vector<8x128xf32>
    %138 = math.exp %137 : vector<8x128xf32>
    %cst_60 = arith.constant 1.000000e+00 : f32
    %139 = vector.broadcast %cst_60 : f32 to vector<8x128xf32>
    %140 = arith.addf %139, %138 : vector<8x128xf32>
    %141 = arith.divf %139, %140 : vector<8x128xf32>
    %142 = vector.extract_strided_slice %129 {offsets = [0, 256], sizes = [8, 128], strides = [1, 1]} : vector<8x512xf32> to vector<8x128xf32>
    %143 = math.tanh %142 : vector<8x128xf32>
    %144 = vector.extract_strided_slice %129 {offsets = [0, 384], sizes = [8, 128], strides = [1, 1]} : vector<8x512xf32> to vector<8x128xf32>
    %145 = arith.negf %144 : vector<8x128xf32>
    %146 = math.exp %145 : vector<8x128xf32>
    %cst_61 = arith.constant 1.000000e+00 : f32
    %147 = vector.broadcast %cst_61 : f32 to vector<8x128xf32>
    %148 = arith.addf %147, %146 : vector<8x128xf32>
    %149 = arith.divf %147, %148 : vector<8x128xf32>
    %150 = arith.mulf %141, %123 : vector<8x128xf32>
    %151 = arith.mulf %135, %143 : vector<8x128xf32>
    %152 = arith.addf %150, %151 : vector<8x128xf32>
    %153 = math.tanh %152 : vector<8x128xf32>
    %154 = arith.mulf %149, %153 : vector<8x128xf32>
    %c32 = arith.constant 32 : index
    %c0_62 = arith.constant 0 : index
    %155 = vector.load %arg8[%c32, %c0_62] : memref<64x512xf32, #tpu.memory_space<vmem>>, vector<8x512xf32>
    %156 = arith.truncf %154 : vector<8x128xf32> to vector<8x128xbf16>
    %cst_63 = arith.constant dense<0.000000e+00> : vector<8x512xf32>
    %157 = tpu.matmul %156, %49, %cst_63 {dimension_numbers = #tpu.dot_dimension_numbers<[1], [0], [0], [1], [0, 0, 1, 1], [], []>} : vector<8x128xbf16>, vector<128x512xbf16>, vector<8x512xf32> -> vector<8x512xf32>
    %158 = arith.addf %155, %157 : vector<8x512xf32>
    %159 = vector.extract_strided_slice %158 {offsets = [0, 0], sizes = [8, 128], strides = [1, 1]} : vector<8x512xf32> to vector<8x128xf32>
    %160 = arith.negf %159 : vector<8x128xf32>
    %161 = math.exp %160 : vector<8x128xf32>
    %cst_64 = arith.constant 1.000000e+00 : f32
    %162 = vector.broadcast %cst_64 : f32 to vector<8x128xf32>
    %163 = arith.addf %162, %161 : vector<8x128xf32>
    %164 = arith.divf %162, %163 : vector<8x128xf32>
    %165 = vector.extract_strided_slice %158 {offsets = [0, 128], sizes = [8, 128], strides = [1, 1]} : vector<8x512xf32> to vector<8x128xf32>
    %166 = arith.negf %165 : vector<8x128xf32>
    %167 = math.exp %166 : vector<8x128xf32>
    %cst_65 = arith.constant 1.000000e+00 : f32
    %168 = vector.broadcast %cst_65 : f32 to vector<8x128xf32>
    %169 = arith.addf %168, %167 : vector<8x128xf32>
    %170 = arith.divf %168, %169 : vector<8x128xf32>
    %171 = vector.extract_strided_slice %158 {offsets = [0, 256], sizes = [8, 128], strides = [1, 1]} : vector<8x512xf32> to vector<8x128xf32>
    %172 = math.tanh %171 : vector<8x128xf32>
    %173 = vector.extract_strided_slice %158 {offsets = [0, 384], sizes = [8, 128], strides = [1, 1]} : vector<8x512xf32> to vector<8x128xf32>
    %174 = arith.negf %173 : vector<8x128xf32>
    %175 = math.exp %174 : vector<8x128xf32>
    %cst_66 = arith.constant 1.000000e+00 : f32
    %176 = vector.broadcast %cst_66 : f32 to vector<8x128xf32>
    %177 = arith.addf %176, %175 : vector<8x128xf32>
    %178 = arith.divf %176, %177 : vector<8x128xf32>
    %179 = arith.mulf %170, %152 : vector<8x128xf32>
    %180 = arith.mulf %164, %172 : vector<8x128xf32>
    %181 = arith.addf %179, %180 : vector<8x128xf32>
    %182 = math.tanh %181 : vector<8x128xf32>
    %183 = arith.mulf %178, %182 : vector<8x128xf32>
    %c40 = arith.constant 40 : index
    %c0_67 = arith.constant 0 : index
    %184 = vector.load %arg8[%c40, %c0_67] : memref<64x512xf32, #tpu.memory_space<vmem>>, vector<8x512xf32>
    %185 = arith.truncf %183 : vector<8x128xf32> to vector<8x128xbf16>
    %cst_68 = arith.constant dense<0.000000e+00> : vector<8x512xf32>
    %186 = tpu.matmul %185, %49, %cst_68 {dimension_numbers = #tpu.dot_dimension_numbers<[1], [0], [0], [1], [0, 0, 1, 1], [], []>} : vector<8x128xbf16>, vector<128x512xbf16>, vector<8x512xf32> -> vector<8x512xf32>
    %187 = arith.addf %184, %186 : vector<8x512xf32>
    %188 = vector.extract_strided_slice %187 {offsets = [0, 0], sizes = [8, 128], strides = [1, 1]} : vector<8x512xf32> to vector<8x128xf32>
    %189 = arith.negf %188 : vector<8x128xf32>
    %190 = math.exp %189 : vector<8x128xf32>
    %cst_69 = arith.constant 1.000000e+00 : f32
    %191 = vector.broadcast %cst_69 : f32 to vector<8x128xf32>
    %192 = arith.addf %191, %190 : vector<8x128xf32>
    %193 = arith.divf %191, %192 : vector<8x128xf32>
    %194 = vector.extract_strided_slice %187 {offsets = [0, 128], sizes = [8, 128], strides = [1, 1]} : vector<8x512xf32> to vector<8x128xf32>
    %195 = arith.negf %194 : vector<8x128xf32>
    %196 = math.exp %195 : vector<8x128xf32>
    %cst_70 = arith.constant 1.000000e+00 : f32
    %197 = vector.broadcast %cst_70 : f32 to vector<8x128xf32>
    %198 = arith.addf %197, %196 : vector<8x128xf32>
    %199 = arith.divf %197, %198 : vector<8x128xf32>
    %200 = vector.extract_strided_slice %187 {offsets = [0, 256], sizes = [8, 128], strides = [1, 1]} : vector<8x512xf32> to vector<8x128xf32>
    %201 = math.tanh %200 : vector<8x128xf32>
    %202 = vector.extract_strided_slice %187 {offsets = [0, 384], sizes = [8, 128], strides = [1, 1]} : vector<8x512xf32> to vector<8x128xf32>
    %203 = arith.negf %202 : vector<8x128xf32>
    %204 = math.exp %203 : vector<8x128xf32>
    %cst_71 = arith.constant 1.000000e+00 : f32
    %205 = vector.broadcast %cst_71 : f32 to vector<8x128xf32>
    %206 = arith.addf %205, %204 : vector<8x128xf32>
    %207 = arith.divf %205, %206 : vector<8x128xf32>
    %208 = arith.mulf %199, %181 : vector<8x128xf32>
    %209 = arith.mulf %193, %201 : vector<8x128xf32>
    %210 = arith.addf %208, %209 : vector<8x128xf32>
    %211 = math.tanh %210 : vector<8x128xf32>
    %212 = arith.mulf %207, %211 : vector<8x128xf32>
    %c48 = arith.constant 48 : index
    %c0_72 = arith.constant 0 : index
    %213 = vector.load %arg8[%c48, %c0_72] : memref<64x512xf32, #tpu.memory_space<vmem>>, vector<8x512xf32>
    %214 = arith.truncf %212 : vector<8x128xf32> to vector<8x128xbf16>
    %cst_73 = arith.constant dense<0.000000e+00> : vector<8x512xf32>
    %215 = tpu.matmul %214, %49, %cst_73 {dimension_numbers = #tpu.dot_dimension_numbers<[1], [0], [0], [1], [0, 0, 1, 1], [], []>} : vector<8x128xbf16>, vector<128x512xbf16>, vector<8x512xf32> -> vector<8x512xf32>
    %216 = arith.addf %213, %215 : vector<8x512xf32>
    %217 = vector.extract_strided_slice %216 {offsets = [0, 0], sizes = [8, 128], strides = [1, 1]} : vector<8x512xf32> to vector<8x128xf32>
    %218 = arith.negf %217 : vector<8x128xf32>
    %219 = math.exp %218 : vector<8x128xf32>
    %cst_74 = arith.constant 1.000000e+00 : f32
    %220 = vector.broadcast %cst_74 : f32 to vector<8x128xf32>
    %221 = arith.addf %220, %219 : vector<8x128xf32>
    %222 = arith.divf %220, %221 : vector<8x128xf32>
    %223 = vector.extract_strided_slice %216 {offsets = [0, 128], sizes = [8, 128], strides = [1, 1]} : vector<8x512xf32> to vector<8x128xf32>
    %224 = arith.negf %223 : vector<8x128xf32>
    %225 = math.exp %224 : vector<8x128xf32>
    %cst_75 = arith.constant 1.000000e+00 : f32
    %226 = vector.broadcast %cst_75 : f32 to vector<8x128xf32>
    %227 = arith.addf %226, %225 : vector<8x128xf32>
    %228 = arith.divf %226, %227 : vector<8x128xf32>
    %229 = vector.extract_strided_slice %216 {offsets = [0, 256], sizes = [8, 128], strides = [1, 1]} : vector<8x512xf32> to vector<8x128xf32>
    %230 = math.tanh %229 : vector<8x128xf32>
    %231 = vector.extract_strided_slice %216 {offsets = [0, 384], sizes = [8, 128], strides = [1, 1]} : vector<8x512xf32> to vector<8x128xf32>
    %232 = arith.negf %231 : vector<8x128xf32>
    %233 = math.exp %232 : vector<8x128xf32>
    %cst_76 = arith.constant 1.000000e+00 : f32
    %234 = vector.broadcast %cst_76 : f32 to vector<8x128xf32>
    %235 = arith.addf %234, %233 : vector<8x128xf32>
    %236 = arith.divf %234, %235 : vector<8x128xf32>
    %237 = arith.mulf %228, %210 : vector<8x128xf32>
    %238 = arith.mulf %222, %230 : vector<8x128xf32>
    %239 = arith.addf %237, %238 : vector<8x128xf32>
    %240 = math.tanh %239 : vector<8x128xf32>
    %241 = arith.mulf %236, %240 : vector<8x128xf32>
    %c56 = arith.constant 56 : index
    %c0_77 = arith.constant 0 : index
    %242 = vector.load %arg8[%c56, %c0_77] : memref<64x512xf32, #tpu.memory_space<vmem>>, vector<8x512xf32>
    %243 = arith.truncf %241 : vector<8x128xf32> to vector<8x128xbf16>
    %cst_78 = arith.constant dense<0.000000e+00> : vector<8x512xf32>
    %244 = tpu.matmul %243, %49, %cst_78 {dimension_numbers = #tpu.dot_dimension_numbers<[1], [0], [0], [1], [0, 0, 1, 1], [], []>} : vector<8x128xbf16>, vector<128x512xbf16>, vector<8x512xf32> -> vector<8x512xf32>
    %245 = arith.addf %242, %244 : vector<8x512xf32>
    %246 = vector.extract_strided_slice %245 {offsets = [0, 0], sizes = [8, 128], strides = [1, 1]} : vector<8x512xf32> to vector<8x128xf32>
    %247 = arith.negf %246 : vector<8x128xf32>
    %248 = math.exp %247 : vector<8x128xf32>
    %cst_79 = arith.constant 1.000000e+00 : f32
    %249 = vector.broadcast %cst_79 : f32 to vector<8x128xf32>
    %250 = arith.addf %249, %248 : vector<8x128xf32>
    %251 = arith.divf %249, %250 : vector<8x128xf32>
    %252 = vector.extract_strided_slice %245 {offsets = [0, 128], sizes = [8, 128], strides = [1, 1]} : vector<8x512xf32> to vector<8x128xf32>
    %253 = arith.negf %252 : vector<8x128xf32>
    %254 = math.exp %253 : vector<8x128xf32>
    %cst_80 = arith.constant 1.000000e+00 : f32
    %255 = vector.broadcast %cst_80 : f32 to vector<8x128xf32>
    %256 = arith.addf %255, %254 : vector<8x128xf32>
    %257 = arith.divf %255, %256 : vector<8x128xf32>
    %258 = vector.extract_strided_slice %245 {offsets = [0, 256], sizes = [8, 128], strides = [1, 1]} : vector<8x512xf32> to vector<8x128xf32>
    %259 = math.tanh %258 : vector<8x128xf32>
    %260 = vector.extract_strided_slice %245 {offsets = [0, 384], sizes = [8, 128], strides = [1, 1]} : vector<8x512xf32> to vector<8x128xf32>
    %261 = arith.negf %260 : vector<8x128xf32>
    %262 = math.exp %261 : vector<8x128xf32>
    %cst_81 = arith.constant 1.000000e+00 : f32
    %263 = vector.broadcast %cst_81 : f32 to vector<8x128xf32>
    %264 = arith.addf %263, %262 : vector<8x128xf32>
    %265 = arith.divf %263, %264 : vector<8x128xf32>
    %266 = arith.mulf %257, %239 : vector<8x128xf32>
    %267 = arith.mulf %251, %259 : vector<8x128xf32>
    %268 = arith.addf %266, %267 : vector<8x128xf32>
    %269 = math.tanh %268 : vector<8x128xf32>
    %270 = arith.mulf %265, %269 : vector<8x128xf32>
    %cst_82 = arith.constant 0.000000e+00 : f32
    %271 = vector.broadcast %cst_82 : f32 to vector<8x128xf32>
    %272 = arith.maximumf %270, %271 : vector<8x128xf32>
    %273 = tpu.concatenate %41, %272 in 1 : vector<8x128xf32>, vector<8x128xf32> -> vector<8x256xf32>
    %274 = arith.truncf %273 : vector<8x256xf32> to vector<8x256xbf16>
    %c0_83 = arith.constant 0 : index
    %c0_84 = arith.constant 0 : index
    %275 = vector.load %arg3[%c0_83, %c0_84] : memref<256x128xbf16, #tpu.memory_space<vmem>>, vector<256x128xbf16>
    %cst_85 = arith.constant dense<0.000000e+00> : vector<8x128xf32>
    %276 = tpu.matmul %274, %275, %cst_85 {dimension_numbers = #tpu.dot_dimension_numbers<[1], [0], [0], [1], [0, 0, 1, 1], [], []>} : vector<8x256xbf16>, vector<256x128xbf16>, vector<8x128xf32> -> vector<8x128xf32>
    %c3 = arith.constant 3 : index
    %c0_86 = arith.constant 0 : index
    %c0_87 = arith.constant 0 : index
    %277 = vector.load %arg5[%c3, %c0_86, %c0_87] : memref<7x8x128xf32, #tpu.memory_space<vmem>>, vector<1x8x128xf32>
    %278 = vector.shape_cast %277 : vector<1x8x128xf32> to vector<8x128xf32>
    %279 = arith.addf %276, %278 : vector<8x128xf32>
    %280 = math.tanh %279 : vector<8x128xf32>
    %281 = arith.truncf %280 : vector<8x128xf32> to vector<8x128xbf16>
    %c3_88 = arith.constant 3 : index
    %c0_89 = arith.constant 0 : index
    %c0_90 = arith.constant 0 : index
    %282 = vector.load %arg1[%c3_88, %c0_89, %c0_90] : memref<6x128x128xbf16, #tpu.memory_space<vmem>>, vector<1x128x128xbf16>
    %283 = vector.shape_cast %282 : vector<1x128x128xbf16> to vector<128x128xbf16>
    %cst_91 = arith.constant dense<0.000000e+00> : vector<8x128xf32>
    %284 = tpu.matmul %281, %283, %cst_91 {dimension_numbers = #tpu.dot_dimension_numbers<[1], [0], [0], [1], [0, 0, 1, 1], [], []>} : vector<8x128xbf16>, vector<128x128xbf16>, vector<8x128xf32> -> vector<8x128xf32>
    %c4 = arith.constant 4 : index
    %c0_92 = arith.constant 0 : index
    %c0_93 = arith.constant 0 : index
    %285 = vector.load %arg5[%c4, %c0_92, %c0_93] : memref<7x8x128xf32, #tpu.memory_space<vmem>>, vector<1x8x128xf32>
    %286 = vector.shape_cast %285 : vector<1x8x128xf32> to vector<8x128xf32>
    %287 = arith.addf %284, %286 : vector<8x128xf32>
    %288 = math.tanh %287 : vector<8x128xf32>
    %289 = arith.truncf %288 : vector<8x128xf32> to vector<8x128xbf16>
    %c4_94 = arith.constant 4 : index
    %c0_95 = arith.constant 0 : index
    %c0_96 = arith.constant 0 : index
    %290 = vector.load %arg1[%c4_94, %c0_95, %c0_96] : memref<6x128x128xbf16, #tpu.memory_space<vmem>>, vector<1x128x128xbf16>
    %291 = vector.shape_cast %290 : vector<1x128x128xbf16> to vector<128x128xbf16>
    %cst_97 = arith.constant dense<0.000000e+00> : vector<8x128xf32>
    %292 = tpu.matmul %289, %291, %cst_97 {dimension_numbers = #tpu.dot_dimension_numbers<[1], [0], [0], [1], [0, 0, 1, 1], [], []>} : vector<8x128xbf16>, vector<128x128xbf16>, vector<8x128xf32> -> vector<8x128xf32>
    %c5 = arith.constant 5 : index
    %c0_98 = arith.constant 0 : index
    %c0_99 = arith.constant 0 : index
    %293 = vector.load %arg5[%c5, %c0_98, %c0_99] : memref<7x8x128xf32, #tpu.memory_space<vmem>>, vector<1x8x128xf32>
    %294 = vector.shape_cast %293 : vector<1x8x128xf32> to vector<8x128xf32>
    %295 = arith.addf %292, %294 : vector<8x128xf32>
    %296 = math.tanh %295 : vector<8x128xf32>
    %297 = arith.truncf %296 : vector<8x128xf32> to vector<8x128xbf16>
    %c5_100 = arith.constant 5 : index
    %c0_101 = arith.constant 0 : index
    %c0_102 = arith.constant 0 : index
    %298 = vector.load %arg1[%c5_100, %c0_101, %c0_102] : memref<6x128x128xbf16, #tpu.memory_space<vmem>>, vector<1x128x128xbf16>
    %299 = vector.shape_cast %298 : vector<1x128x128xbf16> to vector<128x128xbf16>
    %cst_103 = arith.constant dense<0.000000e+00> : vector<8x128xf32>
    %300 = tpu.matmul %297, %299, %cst_103 {dimension_numbers = #tpu.dot_dimension_numbers<[1], [0], [0], [1], [0, 0, 1, 1], [], []>} : vector<8x128xbf16>, vector<128x128xbf16>, vector<8x128xf32> -> vector<8x128xf32>
    %c6 = arith.constant 6 : index
    %c0_104 = arith.constant 0 : index
    %c0_105 = arith.constant 0 : index
    %301 = vector.load %arg5[%c6, %c0_104, %c0_105] : memref<7x8x128xf32, #tpu.memory_space<vmem>>, vector<1x8x128xf32>
    %302 = vector.shape_cast %301 : vector<1x8x128xf32> to vector<8x128xf32>
    %303 = arith.addf %300, %302 : vector<8x128xf32>
    %c0_106 = arith.constant 0 : index
    %c0_107 = arith.constant 0 : index
    %c0_108 = arith.constant 0 : index
    %304 = vector.load %arg7[%c0_106, %c0_107, %c0_108] : memref<3x8x128xf32, #tpu.memory_space<vmem>>, vector<1x8x128xf32>
    %305 = vector.shape_cast %304 : vector<1x8x128xf32> to vector<8x128xf32>
    %306 = vector.shape_cast %303 : vector<8x128xf32> to vector<1x8x128xf32>
    tpu.vector_store %arg7[%c0_106, %c0_107, %c0_108], %306 {strides = array<i32>} : memref<3x8x128xf32, #tpu.memory_space<vmem>>, vector<1x8x128xf32>,
    return
  }
}

</mosaic_0001>

<llo_original>
// kernel: tpu_custom_call.1
$region0: #{tpu_custom_call.1}
  #allocation0 [shape = 'u32[]', space=smem, size = 0x4, offset = 0x4, fixed_abs, tag = 'smem constant byte address 0x4 - core index']
  #allocation1 [shape = 'u32[144,128]{1,0:T(1,128)}', space=vmem, size = 0x12000, scoped, tag = 'internal scratch']
  #allocation2 [shape = 'f32[64,512]{1,0:T(8,128)}', space=vmem, size = 0x20000, scoped, tag = 'scratch operand']
  %s0 = inlined_call_operand.hbm [shape: f32[80,128], index: 0, kind: input, shape index: {}]
  %s1 = inlined_call_operand.hbm [shape: bf16[6,128,128], index: 1, kind: input, shape index: {}]
  %s2 = inlined_call_operand.hbm [shape: bf16[128,256], index: 2, kind: input, shape index: {}]
  %s3 = inlined_call_operand.hbm [shape: bf16[256,128], index: 3, kind: input, shape index: {}]
  %s4 = inlined_call_operand.hbm [shape: bf16[2,128,512], index: 4, kind: input, shape index: {}]
  %s5 = inlined_call_operand.hbm [shape: f32[7,8,128], index: 5, kind: input, shape index: {}]
  %s6 = inlined_call_operand.vmem [shape: f32[8,256], index: 6, kind: input, shape index: {}]
  %s7 = inlined_call_operand.hbm [shape: f32[3,8,128], index: 7, kind: output, shape index: {}]
  %s8 = sld [smem:[#allocation0]]
  $region62: #{tpu_custom_call.1} parent=0
    _
  %s10 = ssub.s32 1, %s8
  %s11 = scalar_select 0, %s10, %s8
  $region1: #{tpu_custom_call.1} parent=0
    #allocation3 [shape = 'u8[40960]{0}', space=vmem, size = 0xa000, scoped, tag = 'input window, operand 0, single buffered']
    #allocation4 [shape = 's32[1]{0}', space=sflag, size = 0x4, scoped, tag = 'scoped memory for tpu_custom_call.1']
    #allocation5 [shape = 's32[1]{0}', space=sflag, size = 0x4, scoped, tag = 'scoped memory for tpu_custom_call.1']
    #allocation6 [shape = 'u8[196608]{0}', space=vmem, size = 0x30000, scoped, tag = 'input window, operand 1, single buffered']
    #allocation7 [shape = 's32[1]{0}', space=sflag, size = 0x4, scoped, tag = 'scoped memory for tpu_custom_call.1']
    #allocation8 [shape = 'u8[65536]{0}', space=vmem, size = 0x10000, scoped, tag = 'input window, operand 2, single buffered']
    #allocation9 [shape = 'u8[65536]{0}', space=vmem, size = 0x10000, scoped, tag = 'input window, operand 3, single buffered']
    #allocation10 [shape = 's32[1]{0}', space=sflag, size = 0x4, scoped, tag = 'scoped memory for tpu_custom_call.1']
    #allocation11 [shape = 'u8[262144]{0}', space=vmem, size = 0x40000, scoped, tag = 'input window, operand 4, single buffered']
    #allocation12 [shape = 'u8[28672]{0}', space=vmem, size = 0x7000, scoped, tag = 'input window, operand 5, single buffered']
    #allocation13 [shape = 's32[1]{0}', space=sflag, size = 0x4, scoped, tag = 'scoped memory for tpu_custom_call.1']
    #allocation14 [shape = 'u8[12288]{0}', space=vmem, size = 0x3000, scoped, tag = 'output window, operand 0, single buffered']
    %12 = vsyncpa [#allocation4], 0
    %13 = vsyncpa [#allocation7], 0
    %14 = vsyncpa [#allocation10], 0
    %15 = vsyncpa [#allocation13], 0
    %16 = vsyncpa [#allocation5], 0
    // Predicated region
    $region2: #{tpu_custom_call.1} parent=1 // pred_check
      _
    $region3: #{tpu_custom_call.1} parent=1 // pred_check_branch
      %18 = sbr.rel (0) target = $region5
    $region4: #{tpu_custom_call.1} parent=1 // pred_region
      %s20 = ssub.s32 1280, 1280
      %21 = vsyncadd [#allocation4], %s20
      %s22 = sshll.u32 [#allocation3], 4
      %s23 = int_to_ptr.vmem [resolvable:$true] %s22
      %28 = dma.hbm_to_vmem [thread:$0]  %s0, 1280, %s23, [#allocation4], 128, 128, 8
    $region5: #{tpu_custom_call.1} parent=1 // pred_fallthru
      _
    // Predicated region
    $region6: #{tpu_custom_call.1} parent=1 // pred_check
      _
    $region7: #{tpu_custom_call.1} parent=1 // pred_check_branch
      %30 = sbr.rel (0) target = $region9
    $region8: #{tpu_custom_call.1} parent=1 // pred_region
      %s32 = ssub.s32 6144, 6144
      %33 = vsyncadd [#allocation7], %s32
      %s34 = sshll.u32 [#allocation6], 4
      %s35 = int_to_ptr.vmem [resolvable:$true] %s34
      %40 = dma.hbm_to_vmem [thread:$0]  %s1, 6144, %s35, [#allocation7], 64, 64, 4
    $region9: #{tpu_custom_call.1} parent=1 // pred_fallthru
      _
    // Predicated region
    $region10: #{tpu_custom_call.1} parent=1 // pred_check
      _
    $region11: #{tpu_custom_call.1} parent=1 // pred_check_branch
      %42 = sbr.rel (0) target = $region13
    $region12: #{tpu_custom_call.1} parent=1 // pred_region
      %s44 = ssub.s32 2048, 2048
      %45 = vsyncadd [#allocation7], %s44
      %s46 = sshll.u32 [#allocation8], 4
      %s47 = int_to_ptr.vmem [resolvable:$true] %s46
      %52 = dma.hbm_to_vmem [thread:$0]  %s2, 2048, %s47, [#allocation7], 128, 128, 8
    $region13: #{tpu_custom_call.1} parent=1 // pred_fallthru
      _
    // Predicated region
    $region14: #{tpu_custom_call.1} parent=1 // pred_check
      _
    $region15: #{tpu_custom_call.1} parent=1 // pred_check_branch
      %54 = sbr.rel (0) target = $region17
    $region16: #{tpu_custom_call.1} parent=1 // pred_region
      %s56 = ssub.s32 2048, 2048
      %57 = vsyncadd [#allocation10], %s56
      %s58 = sshll.u32 [#allocation9], 4
      %s59 = int_to_ptr.vmem [resolvable:$true] %s58
      %64 = dma.hbm_to_vmem [thread:$0]  %s3, 2048, %s59, [#allocation10], 64, 64, 4
    $region17: #{tpu_custom_call.1} parent=1 // pred_fallthru
      _
    // Predicated region
    $region18: #{tpu_custom_call.1} parent=1 // pred_check
      _
    $region19: #{tpu_custom_call.1} parent=1 // pred_check_branch
      %66 = sbr.rel (0) target = $region21
    $region20: #{tpu_custom_call.1} parent=1 // pred_region
      %s68 = ssub.s32 8192, 8192
      %69 = vsyncadd [#allocation10], %s68
      %s70 = sshll.u32 [#allocation11], 4
      %s71 = int_to_ptr.vmem [resolvable:$true] %s70
      %76 = dma.hbm_to_vmem [thread:$0]  %s4, 8192, %s71, [#allocation10], 256, 256, 16
    $region21: #{tpu_custom_call.1} parent=1 // pred_fallthru
      _
    // Predicated region
    $region22: #{tpu_custom_call.1} parent=1 // pred_check
      _
    $region23: #{tpu_custom_call.1} parent=1 // pred_check_branch
      %78 = sbr.rel (0) target = $region25
    $region24: #{tpu_custom_call.1} parent=1 // pred_region
      %s80 = ssub.s32 896, 896
      %81 = vsyncadd [#allocation13], %s80
      %s82 = sshll.u32 [#allocation12], 4
      %s83 = int_to_ptr.vmem [resolvable:$true] %s82
      %88 = dma.hbm_to_vmem [thread:$0]  %s5, 896, %s83, [#allocation13], 128, 128, 8
    $region25: #{tpu_custom_call.1} parent=1 // pred_fallthru
      _
    // Predicated region
    $region26: #{tpu_custom_call.1} parent=1 // pred_check
      _
    $region27: #{tpu_custom_call.1} parent=1 // pred_check_branch
      %90 = sbr.rel (0) target = $region29
    $region28: #{tpu_custom_call.1} parent=1 // pred_region
      _
    $region29: #{tpu_custom_call.1} parent=1 // pred_fallthru
      _
    // Predicated region
    $region30: #{tpu_custom_call.1} parent=1 // pred_check
      _
    $region31: #{tpu_custom_call.1} parent=1 // pred_check_branch
      %92 = sbr.rel (0) target = $region33
    $region32: #{tpu_custom_call.1} parent=1 // pred_region
      %93 = dma.done [#allocation4], 1280
    $region33: #{tpu_custom_call.1} parent=1 // pred_fallthru
      _
    // Predicated region
    $region34: #{tpu_custom_call.1} parent=1 // pred_check
      _
    $region35: #{tpu_custom_call.1} parent=1 // pred_check_branch
      %95 = sbr.rel (0) target = $region37
    $region36: #{tpu_custom_call.1} parent=1 // pred_region
      %96 = dma.done [#allocation7], 6144
    $region37: #{tpu_custom_call.1} parent=1 // pred_fallthru
      _
    // Predicated region
    $region38: #{tpu_custom_call.1} parent=1 // pred_check
      _
    $region39: #{tpu_custom_call.1} parent=1 // pred_check_branch
      %98 = sbr.rel (0) target = $region41
    $region40: #{tpu_custom_call.1} parent=1 // pred_region
      %99 = dma.done [#allocation7], 2048
    $region41: #{tpu_custom_call.1} parent=1 // pred_fallthru
      _
    // Predicated region
    $region42: #{tpu_custom_call.1} parent=1 // pred_check
      _
    $region43: #{tpu_custom_call.1} parent=1 // pred_check_branch
      %101 = sbr.rel (0) target = $region45
    $region44: #{tpu_custom_call.1} parent=1 // pred_region
      %102 = dma.done [#allocation10], 2048
    $region45: #{tpu_custom_call.1} parent=1 // pred_fallthru
      _
    // Predicated region
    $region46: #{tpu_custom_call.1} parent=1 // pred_check
      _
    $region47: #{tpu_custom_call.1} parent=1 // pred_check_branch
      %104 = sbr.rel (0) target = $region49
    $region48: #{tpu_custom_call.1} parent=1 // pred_region
      %105 = dma.done [#allocation10], 8192
    $region49: #{tpu_custom_call.1} parent=1 // pred_fallthru
      _
    // Predicated region
    $region50: #{tpu_custom_call.1} parent=1 // pred_check
      _
    $region51: #{tpu_custom_call.1} parent=1 // pred_check_branch
      %107 = sbr.rel (0) target = $region53
    $region52: #{tpu_custom_call.1} parent=1 // pred_region
      %108 = dma.done [#allocation13], 896
    $region53: #{tpu_custom_call.1} parent=1 // pred_fallthru
      _
    %v110 = vld [vmem:[#allocation3] sm:$0xff]
    %v111 = vld [vmem:[#allocation3 + $0x8] sm:$0xff]
    %v112 = vpack.c.bf16 %v110, %v110
    %v113 = vld [vmem:[#allocation6] sm:$0xf]
    %v114 = vld [vmem:[#allocation6 + $0x4] sm:$0xf]
    %v115 = vld [vmem:[#allocation6 + $0x8] sm:$0xf]
    %v116 = vld [vmem:[#allocation6 + $0xc] sm:$0xf]
    %v117 = vld [vmem:[#allocation6 + $0x10] sm:$0xf]
    %v118 = vld [vmem:[#allocation6 + $0x14] sm:$0xf]
    %v119 = vld [vmem:[#allocation6 + $0x18] sm:$0xf]
    %v120 = vld [vmem:[#allocation6 + $0x1c] sm:$0xf]
    %v121 = vld [vmem:[#allocation6 + $0x20] sm:$0xf]
    %v122 = vld [vmem:[#allocation6 + $0x24] sm:$0xf]
    %v123 = vld [vmem:[#allocation6 + $0x28] sm:$0xf]
    %v124 = vld [vmem:[#allocation6 + $0x2c] sm:$0xf]
    %v125 = vld [vmem:[#allocation6 + $0x30] sm:$0xf]
    %v126 = vld [vmem:[#allocation6 + $0x34] sm:$0xf]
    %v127 = vld [vmem:[#allocation6 + $0x38] sm:$0xf]
    %v128 = vld [vmem:[#allocation6 + $0x3c] sm:$0xf]
    %v129 = vld [vmem:[#allocation12] sm:$0xff]
    %v146 = vunpack.c.l.b16 %v113
    %v147 = vunpack.c.l.b16 %v114
    %v148 = vunpack.c.l.b16 %v115
    %v149 = vunpack.c.l.b16 %v116
    %v150 = vunpack.c.l.b16 %v117
    %v151 = vunpack.c.l.b16 %v118
    %v152 = vunpack.c.l.b16 %v119
    %v153 = vunpack.c.l.b16 %v120
    %v154 = vunpack.c.l.b16 %v121
    %v155 = vunpack.c.l.b16 %v122
    %v156 = vunpack.c.l.b16 %v123
    %v157 = vunpack.c.l.b16 %v124
    %v158 = vunpack.c.l.b16 %v125
    %v159 = vunpack.c.l.b16 %v126
    %v160 = vunpack.c.l.b16 %v127
    %v161 = vunpack.c.l.b16 %v128
    %v162 = vpack.c.b16 %v147, %v146
    %v163 = vpack.c.b16 %v149, %v148
    %v164 = vpack.c.b16 %v151, %v150
    %v165 = vpack.c.b16 %v153, %v152
    %v166 = vpack.c.b16 %v155, %v154
    %v167 = vpack.c.b16 %v157, %v156
    %v168 = vpack.c.b16 %v159, %v158
    %v169 = vpack.c.b16 %v161, %v160
    %178 = vmatprep.subr.bf16.mxu0 0
    %179 = vmatpush1.bf16.msra.mxu0 %v162
    %180 = vmatprep.subr.bf16.mxu0 0
    %181 = vmatpush1.bf16.msra.mxu0 %v163
    %182 = vmatprep.subr.bf16.mxu0 0
    %183 = vmatpush1.bf16.msra.mxu0 %v164
    %184 = vmatprep.subr.bf16.mxu0 0
    %185 = vmatpush1.bf16.msra.mxu0 %v165
    %186 = vmatprep.subr.bf16.mxu0 0
    %187 = vmatpush1.bf16.msra.mxu0 %v166
    %188 = vmatprep.subr.bf16.mxu0 0
    %189 = vmatpush1.bf16.msra.mxu0 %v167
    %190 = vmatprep.subr.bf16.mxu0 0
    %191 = vmatpush1.bf16.msra.mxu0 %v168
    %192 = vmatprep.subr.bf16.mxu0 0
    %193 = vmatpush1.bf16.msra.mxu0 %v169
    %194 = vmatprep.subr.bf16.mxu0 0
    %195 = vmatpush1.bf16.msra.mxu0 0
    %196 = vmatprep.subr.bf16.mxu0 0
    %197 = vmatpush1.bf16.msra.mxu0 0
    %198 = vmatprep.subr.bf16.mxu0 0
    %199 = vmatpush1.bf16.msra.mxu0 0
    %200 = vmatprep.subr.bf16.mxu0 0
    %201 = vmatpush1.bf16.msra.mxu0 0
    %202 = vmatprep.subr.bf16.mxu0 0
    %203 = vmatpush1.bf16.msra.mxu0 0
    %204 = vmatprep.subr.bf16.mxu0 0
    %205 = vmatpush1.bf16.msra.mxu0 0
    %206 = vmatprep.subr.bf16.mxu0 0
    %207 = vmatpush1.bf16.msra.mxu0 0
    %208 = vmatprep.subr.bf16.mxu0 0
    %209 = vmatpush1.bf16.msra.mxu0 0
    %210 = vmatprep.mubr.bf16.mxu0 0
    %211 = vmatmul.mubr.bf16.gmra.mrb[0].mxu0 %v112
    %v212 = vpop.f32.mrb[0].mxu0
    %v213 = vadd.f32 %v129, %v212
    %v214 = vpop.f32.mrb[0].mxu0
    %v215 = vpop.f32.mrb[0].mxu0
    %v216 = vpop.f32.mrb[0].mxu0
    %217 = vdwg.mxu0
    %v218 = vtanh.pop %v213
    %v219 = vpack.c.bf16 %v218, %v218
    %s220 = scalar_lea.vmem [#allocation6], 64
    %v221 = vld [vmem:[%s220] sm:$0xf]
    %v222 = vld [vmem:[%s220 + $0x4] sm:$0xf]
    %v223 = vld [vmem:[%s220 + $0x8] sm:$0xf]
    %v224 = vld [vmem:[%s220 + $0xc] sm:$0xf]
    %v225 = vld [vmem:[%s220 + $0x10] sm:$0xf]
    %v226 = vld [vmem:[%s220 + $0x14] sm:$0xf]
    %v227 = vld [vmem:[%s220 + $0x18] sm:$0xf]
    %v228 = vld [vmem:[%s220 + $0x1c] sm:$0xf]
    %v229 = vld [vmem:[%s220 + $0x20] sm:$0xf]
    %v230 = vld [vmem:[%s220 + $0x24] sm:$0xf]
    %v231 = vld [vmem:[%s220 + $0x28] sm:$0xf]
    %v232 = vld [vmem:[%s220 + $0x2c] sm:$0xf]
    %v233 = vld [vmem:[%s220 + $0x30] sm:$0xf]
    %v234 = vld [vmem:[%s220 + $0x34] sm:$0xf]
    %v235 = vld [vmem:[%s220 + $0x38] sm:$0xf]
    %v236 = vld [vmem:[%s220 + $0x3c] sm:$0xf]
    %s237 = scalar_lea.vmem [#allocation12], 8
    %v238 = vld [vmem:[%s237] sm:$0xff]
    %v255 = vunpack.c.l.b16 %v221
    %v256 = vunpack.c.l.b16 %v222
    %v257 = vunpack.c.l.b16 %v223
    %v258 = vunpack.c.l.b16 %v224
    %v259 = vunpack.c.l.b16 %v225
    %v260 = vunpack.c.l.b16 %v226
    %v261 = vunpack.c.l.b16 %v227
    %v262 = vunpack.c.l.b16 %v228
    %v263 = vunpack.c.l.b16 %v229
    %v264 = vunpack.c.l.b16 %v230
    %v265 = vunpack.c.l.b16 %v231
    %v266 = vunpack.c.l.b16 %v232
    %v267 = vunpack.c.l.b16 %v233
    %v268 = vunpack.c.l.b16 %v234
    %v269 = vunpack.c.l.b16 %v235
    %v270 = vunpack.c.l.b16 %v236
    %v271 = vpack.c.b16 %v256, %v255
    %v272 = vpack.c.b16 %v258, %v257
    %v273 = vpack.c.b16 %v260, %v259
    %v274 = vpack.c.b16 %v262, %v261
    %v275 = vpack.c.b16 %v264, %v263
    %v276 = vpack.c.b16 %v266, %v265
    %v277 = vpack.c.b16 %v268, %v267
    %v278 = vpack.c.b16 %v270, %v269
    %287 = vmatprep.subr.bf16.mxu0 0
    %288 = vmatpush1.bf16.msra.mxu0 %v271
    %289 = vmatprep.subr.bf16.mxu0 0
    %290 = vmatpush1.bf16.msra.mxu0 %v272
    %291 = vmatprep.subr.bf16.mxu0 0
    %292 = vmatpush1.bf16.msra.mxu0 %v273
    %293 = vmatprep.subr.bf16.mxu0 0
    %294 = vmatpush1.bf16.msra.mxu0 %v274
    %295 = vmatprep.subr.bf16.mxu0 0
    %296 = vmatpush1.bf16.msra.mxu0 %v275
    %297 = vmatprep.subr.bf16.mxu0 0
    %298 = vmatpush1.bf16.msra.mxu0 %v276
    %299 = vmatprep.subr.bf16.mxu0 0
    %300 = vmatpush1.bf16.msra.mxu0 %v277
    %301 = vmatprep.subr.bf16.mxu0 0
    %302 = vmatpush1.bf16.msra.mxu0 %v278
    %303 = vmatprep.subr.bf16.mxu0 0
    %304 = vmatpush1.bf16.msra.mxu0 0
    %305 = vmatprep.subr.bf16.mxu0 0
    %306 = vmatpush1.bf16.msra.mxu0 0
    %307 = vmatprep.subr.bf16.mxu0 0
    %308 = vmatpush1.bf16.msra.mxu0 0
    %309 = vmatprep.subr.bf16.mxu0 0
    %310 = vmatpush1.bf16.msra.mxu0 0
    %311 = vmatprep.subr.bf16.mxu0 0
    %312 = vmatpush1.bf16.msra.mxu0 0
    %313 = vmatprep.subr.bf16.mxu0 0
    %314 = vmatpush1.bf16.msra.mxu0 0
    %315 = vmatprep.subr.bf16.mxu0 0
    %316 = vmatpush1.bf16.msra.mxu0 0
    %317 = vmatprep.subr.bf16.mxu0 0
    %318 = vmatpush1.bf16.msra.mxu0 0
    %319 = vmatprep.mubr.bf16.mxu0 0
    %320 = vmatmul.mubr.bf16.gmra.mrb[0].mxu0 %v219
    %v321 = vpop.f32.mrb[0].mxu0
    %v322 = vadd.f32 %v238, %v321
    %v323 = vpop.f32.mrb[0].mxu0
    %v324 = vpop.f32.mrb[0].mxu0
    %v325 = vpop.f32.mrb[0].mxu0
    %326 = vdwg.mxu0
    %v327 = vtanh.pop %v322
    %v328 = vpack.c.bf16 %v327, %v327
    %s329 = scalar_lea.vmem [#allocation6], 128
    %v330 = vld [vmem:[%s329] sm:$0xf]
    %v331 = vld [vmem:[%s329 + $0x4] sm:$0xf]
    %v332 = vld [vmem:[%s329 + $0x8] sm:$0xf]
    %v333 = vld [vmem:[%s329 + $0xc] sm:$0xf]
    %v334 = vld [vmem:[%s329 + $0x10] sm:$0xf]
    %v335 = vld [vmem:[%s329 + $0x14] sm:$0xf]
    %v336 = vld [vmem:[%s329 + $0x18] sm:$0xf]
    %v337 = vld [vmem:[%s329 + $0x1c] sm:$0xf]
    %v338 = vld [vmem:[%s329 + $0x20] sm:$0xf]
    %v339 = vld [vmem:[%s329 + $0x24] sm:$0xf]
    %v340 = vld [vmem:[%s329 + $0x28] sm:$0xf]
    %v341 = vld [vmem:[%s329 + $0x2c] sm:$0xf]
    %v342 = vld [vmem:[%s329 + $0x30] sm:$0xf]
    %v343 = vld [vmem:[%s329 + $0x34] sm:$0xf]
    %v344 = vld [vmem:[%s329 + $0x38] sm:$0xf]
    %v345 = vld [vmem:[%s329 + $0x3c] sm:$0xf]
    %s346 = scalar_lea.vmem [#allocation12], 16
    %v347 = vld [vmem:[%s346] sm:$0xff]
    %v364 = vunpack.c.l.b16 %v330
    %v365 = vunpack.c.l.b16 %v331
    %v366 = vunpack.c.l.b16 %v332
    %v367 = vunpack.c.l.b16 %v333
    %v368 = vunpack.c.l.b16 %v334
    %v369 = vunpack.c.l.b16 %v335
    %v370 = vunpack.c.l.b16 %v336
    %v371 = vunpack.c.l.b16 %v337
    %v372 = vunpack.c.l.b16 %v338
    %v373 = vunpack.c.l.b16 %v339
    %v374 = vunpack.c.l.b16 %v340
    %v375 = vunpack.c.l.b16 %v341
    %v376 = vunpack.c.l.b16 %v342
    %v377 = vunpack.c.l.b16 %v343
    %v378 = vunpack.c.l.b16 %v344
    %v379 = vunpack.c.l.b16 %v345
    %v380 = vpack.c.b16 %v365, %v364
    %v381 = vpack.c.b16 %v367, %v366
    %v382 = vpack.c.b16 %v369, %v368
    %v383 = vpack.c.b16 %v371, %v370
    %v384 = vpack.c.b16 %v373, %v372
    %v385 = vpack.c.b16 %v375, %v374
    %v386 = vpack.c.b16 %v377, %v376
    %v387 = vpack.c.b16 %v379, %v378
    %396 = vmatprep.subr.bf16.mxu0 0
    %397 = vmatpush1.bf16.msra.mxu0 %v380
    %398 = vmatprep.subr.bf16.mxu0 0
    %399 = vmatpush1.bf16.msra.mxu0 %v381
    %400 = vmatprep.subr.bf16.mxu0 0
    %401 = vmatpush1.bf16.msra.mxu0 %v382
    %402 = vmatprep.subr.bf16.mxu0 0
    %403 = vmatpush1.bf16.msra.mxu0 %v383
    %404 = vmatprep.subr.bf16.mxu0 0
    %405 = vmatpush1.bf16.msra.mxu0 %v384
    %406 = vmatprep.subr.bf16.mxu0 0
    %407 = vmatpush1.bf16.msra.mxu0 %v385
    %408 = vmatprep.subr.bf16.mxu0 0
    %409 = vmatpush1.bf16.msra.mxu0 %v386
    %410 = vmatprep.subr.bf16.mxu0 0
    %411 = vmatpush1.bf16.msra.mxu0 %v387
    %412 = vmatprep.subr.bf16.mxu0 0
    %413 = vmatpush1.bf16.msra.mxu0 0
    %414 = vmatprep.subr.bf16.mxu0 0
    %415 = vmatpush1.bf16.msra.mxu0 0
    %416 = vmatprep.subr.bf16.mxu0 0
    %417 = vmatpush1.bf16.msra.mxu0 0
    %418 = vmatprep.subr.bf16.mxu0 0
    %419 = vmatpush1.bf16.msra.mxu0 0
    %420 = vmatprep.subr.bf16.mxu0 0
    %421 = vmatpush1.bf16.msra.mxu0 0
    %422 = vmatprep.subr.bf16.mxu0 0
    %423 = vmatpush1.bf16.msra.mxu0 0
    %424 = vmatprep.subr.bf16.mxu0 0
    %425 = vmatpush1.bf16.msra.mxu0 0
    %426 = vmatprep.subr.bf16.mxu0 0
    %427 = vmatpush1.bf16.msra.mxu0 0
    %428 = vmatprep.mubr.bf16.mxu0 0
    %429 = vmatmul.mubr.bf16.gmra.mrb[0].mxu0 %v328
    %v430 = vpop.f32.mrb[0].mxu0
    %v431 = vadd.f32 %v347, %v430
    %v432 = vpop.f32.mrb[0].mxu0
    %v433 = vpop.f32.mrb[0].mxu0
    %v434 = vpop.f32.mrb[0].mxu0
    %435 = vdwg.mxu0
    %v436 = vtanh.pop %v431
    %v437 = vpack.c.bf16 %v436, %v436
    %v438 = vld [vmem:[#allocation8] sm:$0xff]
    %v439 = vld [vmem:[#allocation8 + $0x8] sm:$0xff]
    %v440 = vld [vmem:[#allocation8 + $0x10] sm:$0xff]
    %v441 = vld [vmem:[#allocation8 + $0x18] sm:$0xff]
    %v442 = vld [vmem:[#allocation8 + $0x20] sm:$0xff]
    %v443 = vld [vmem:[#allocation8 + $0x28] sm:$0xff]
    %v444 = vld [vmem:[#allocation8 + $0x30] sm:$0xff]
    %v445 = vld [vmem:[#allocation8 + $0x38] sm:$0xff]
    %v446 = vld [vmem:[#allocation8 + $0x40] sm:$0xff]
    %v447 = vld [vmem:[#allocation8 + $0x48] sm:$0xff]
    %v448 = vld [vmem:[#allocation8 + $0x50] sm:$0xff]
    %v449 = vld [vmem:[#allocation8 + $0x58] sm:$0xff]
    %v450 = vld [vmem:[#allocation8 + $0x60] sm:$0xff]
    %v451 = vld [vmem:[#allocation8 + $0x68] sm:$0xff]
    %v452 = vld [vmem:[#allocation8 + $0x70] sm:$0xff]
    %v453 = vld [vmem:[#allocation8 + $0x78] sm:$0xff]
    %v454 = vld [vmem:[%s6] sm:$0xff]
    %v455 = vld [vmem:[%s6 + $0x8] sm:$0xff]
    %v472 = vunpack.c.l.b16 %v438
    %v473 = vunpack.c.h.b16 %v438
    %v474 = vunpack.c.l.b16 %v439
    %v475 = vunpack.c.h.b16 %v439
    %v476 = vunpack.c.l.b16 %v440
    %v477 = vunpack.c.h.b16 %v440
    %v478 = vunpack.c.l.b16 %v441
    %v479 = vunpack.c.h.b16 %v441
    %v480 = vunpack.c.l.b16 %v442
    %v481 = vunpack.c.h.b16 %v442
    %v482 = vunpack.c.l.b16 %v443
    %v483 = vunpack.c.h.b16 %v443
    %v484 = vunpack.c.l.b16 %v444
    %v485 = vunpack.c.h.b16 %v444
    %v486 = vunpack.c.l.b16 %v445
    %v487 = vunpack.c.h.b16 %v445
    %v488 = vunpack.c.l.b16 %v446
    %v489 = vunpack.c.h.b16 %v446
    %v490 = vunpack.c.l.b16 %v447
    %v491 = vunpack.c.h.b16 %v447
    %v492 = vunpack.c.l.b16 %v448
    %v493 = vunpack.c.h.b16 %v448
    %v494 = vunpack.c.l.b16 %v449
    %v495 = vunpack.c.h.b16 %v449
    %v496 = vunpack.c.l.b16 %v450
    %v497 = vunpack.c.h.b16 %v450
    %v498 = vunpack.c.l.b16 %v451
    %v499 = vunpack.c.h.b16 %v451
    %v500 = vunpack.c.l.b16 %v452
    %v501 = vunpack.c.h.b16 %v452
    %v502 = vunpack.c.l.b16 %v453
    %v503 = vunpack.c.h.b16 %v453
    %v504 = vpack.c.b16 %v474, %v472
    %v505 = vpack.c.b16 %v475, %v473
    %v506 = vpack.c.b16 %v478, %v476
    %v507 = vpack.c.b16 %v479, %v477
    %v508 = vpack.c.b16 %v482, %v480
    %v509 = vpack.c.b16 %v483, %v481
    %v510 = vpack.c.b16 %v486, %v484
    %v511 = vpack.c.b16 %v487, %v485
    %v512 = vpack.c.b16 %v490, %v488
    %v513 = vpack.c.b16 %v491, %v489
    %v514 = vpack.c.b16 %v494, %v492
    %v515 = vpack.c.b16 %v495, %v493
    %v516 = vpack.c.b16 %v498, %v496
    %v517 = vpack.c.b16 %v499, %v497
    %v518 = vpack.c.b16 %v502, %v500
    %v519 = vpack.c.b16 %v503, %v501
    %536 = vmatprep.subr.bf16.mxu0 %v505
    %537 = vmatpush1.bf16.msra.mxu0 %v504
    %538 = vmatprep.subr.bf16.mxu0 %v507
    %539 = vmatpush1.bf16.msra.mxu0 %v506
    %540 = vmatprep.subr.bf16.mxu0 %v509
    %541 = vmatpush1.bf16.msra.mxu0 %v508
    %542 = vmatprep.subr.bf16.mxu0 %v511
    %543 = vmatpush1.bf16.msra.mxu0 %v510
    %544 = vmatprep.subr.bf16.mxu0 %v513
    %545 = vmatpush1.bf16.msra.mxu0 %v512
    %546 = vmatprep.subr.bf16.mxu0 %v515
    %547 = vmatpush1.bf16.msra.mxu0 %v514
    %548 = vmatprep.subr.bf16.mxu0 %v517
    %549 = vmatpush1.bf16.msra.mxu0 %v516
    %550 = vmatprep.subr.bf16.mxu0 %v519
    %551 = vmatpush1.bf16.msra.mxu0 %v518
    %552 = vmatprep.subr.bf16.mxu0 0
    %553 = vmatpush1.bf16.msra.mxu0 0
    %554 = vmatprep.subr.bf16.mxu0 0
    %555 = vmatpush1.bf16.msra.mxu0 0
    %556 = vmatprep.subr.bf16.mxu0 0
    %557 = vmatpush1.bf16.msra.mxu0 0
    %558 = vmatprep.subr.bf16.mxu0 0
    %559 = vmatpush1.bf16.msra.mxu0 0
    %560 = vmatprep.subr.bf16.mxu0 0
    %561 = vmatpush1.bf16.msra.mxu0 0
    %562 = vmatprep.subr.bf16.mxu0 0
    %563 = vmatpush1.bf16.msra.mxu0 0
    %564 = vmatprep.subr.bf16.mxu0 0
    %565 = vmatpush1.bf16.msra.mxu0 0
    %566 = vmatprep.subr.bf16.mxu0 0
    %567 = vmatpush1.bf16.msra.mxu0 0
    %568 = vmatprep.mubr.bf16.mxu0 0
    %569 = vmatmul.mubr.bf16.gmra.mrb[0].mxu0 %v437
    %v570 = vpop.f32.mrb[0].mxu0
    %v571 = vadd.f32 %v454, %v570
    %v572 = vpop.f32.mrb[0].mxu0
    %v573 = vadd.f32 %v455, %v572
    %v574 = vpop.f32.mrb[0].mxu0
    %v575 = vpop.f32.mrb[0].mxu0
    %576 = vdwg.mxu0
    %s577 = scalar_lea.vmem [#allocation14], 8
    %578 = vst [vmem:[%s577] sm:$0xff] %v571
    %s579 = scalar_lea.vmem [#allocation14], 16
    %580 = vst [vmem:[%s579] sm:$0xff] %v573
    %v581 = vmul.f32 %v573, 1.442695
    %v582 = vpow.pop %v581
    %v583 = vmul.f32 %v111, %v582
    %v584 = vadd.f32 %v571, %v583
    %v585 = vld [vmem:[#allocation3 + $0x10] sm:$0xff]
    %v586 = vld [vmem:[#allocation3 + $0x18] sm:$0xff]
    %v587 = vld [vmem:[#allocation3 + $0x20] sm:$0xff]
    %v588 = vld [vmem:[#allocation3 + $0x28] sm:$0xff]
    %v589 = vld [vmem:[#allocation3 + $0x30] sm:$0xff]
    %v590 = vld [vmem:[#allocation3 + $0x38] sm:$0xff]
    %v591 = vld [vmem:[#allocation3 + $0x40] sm:$0xff]
    %v592 = vld [vmem:[#allocation3 + $0x48] sm:$0xff]
    %v593 = vpack.c.bf16 %v586, %v585
    %v594 = vpack.c.bf16 %v588, %v587
    %v595 = vpack.c.bf16 %v590, %v589
    %v596 = vpack.c.bf16 %v592, %v591
    %v597 = vld [vmem:[#allocation11] sm:$0xff]
    %v598 = vld [vmem:[#allocation11 + $0x8] sm:$0xff]
    %v599 = vld [vmem:[#allocation11 + $0x10] sm:$0xff]
    %v600 = vld [vmem:[#allocation11 + $0x18] sm:$0xff]
    %v601 = vld [vmem:[#allocation11 + $0x20] sm:$0xff]
    %v602 = vld [vmem:[#allocation11 + $0x28] sm:$0xff]
    %v603 = vld [vmem:[#allocation11 + $0x30] sm:$0xff]
    %v604 = vld [vmem:[#allocation11 + $0x38] sm:$0xff]
    %v605 = vld [vmem:[#allocation11 + $0x40] sm:$0xff]
    %v606 = vld [vmem:[#allocation11 + $0x48] sm:$0xff]
    %v607 = vld [vmem:[#allocation11 + $0x50] sm:$0xff]
    %v608 = vld [vmem:[#allocation11 + $0x58] sm:$0xff]
    %v609 = vld [vmem:[#allocation11 + $0x60] sm:$0xff]
    %v610 = vld [vmem:[#allocation11 + $0x68] sm:$0xff]
    %v611 = vld [vmem:[#allocation11 + $0x70] sm:$0xff]
    %v612 = vld [vmem:[#allocation11 + $0x78] sm:$0xff]
    %v613 = vld [vmem:[#allocation11 + $0x80] sm:$0xff]
    %v614 = vld [vmem:[#allocation11 + $0x88] sm:$0xff]
    %v615 = vld [vmem:[#allocation11 + $0x90] sm:$0xff]
    %v616 = vld [vmem:[#allocation11 + $0x98] sm:$0xff]
    %v617 = vld [vmem:[#allocation11 + $0xa0] sm:$0xff]
    %v618 = vld [vmem:[#allocation11 + $0xa8] sm:$0xff]
    %v619 = vld [vmem:[#allocation11 + $0xb0] sm:$0xff]
    %v620 = vld [vmem:[#allocation11 + $0xb8] sm:$0xff]
    %v621 = vld [vmem:[#allocation11 + $0xc0] sm:$0xff]
    %v622 = vld [vmem:[#allocation11 + $0xc8] sm:$0xff]
    %v623 = vld [vmem:[#allocation11 + $0xd0] sm:$0xff]
    %v624 = vld [vmem:[#allocation11 + $0xd8] sm:$0xff]
    %v625 = vld [vmem:[#allocation11 + $0xe0] sm:$0xff]
    %v626 = vld [vmem:[#allocation11 + $0xe8] sm:$0xff]
    %v627 = vld [vmem:[#allocation11 + $0xf0] sm:$0xff]
    %v628 = vld [vmem:[#allocation11 + $0xf8] sm:$0xff]
    %v661 = vunpack.c.l.b16 %v597
    %v662 = vunpack.c.h.b16 %v597
    %v663 = vunpack.c.l.b16 %v598
    %v664 = vunpack.c.h.b16 %v598
    %v665 = vunpack.c.l.b16 %v599
    %v666 = vunpack.c.h.b16 %v599
    %v667 = vunpack.c.l.b16 %v600
    %v668 = vunpack.c.h.b16 %v600
    %v669 = vunpack.c.l.b16 %v601
    %v670 = vunpack.c.h.b16 %v601
    %v671 = vunpack.c.l.b16 %v602
    %v672 = vunpack.c.h.b16 %v602
    %v673 = vunpack.c.l.b16 %v603
    %v674 = vunpack.c.h.b16 %v603
    %v675 = vunpack.c.l.b16 %v604
    %v676 = vunpack.c.h.b16 %v604
    %v677 = vunpack.c.l.b16 %v605
    %v678 = vunpack.c.h.b16 %v605
    %v679 = vunpack.c.l.b16 %v606
    %v680 = vunpack.c.h.b16 %v606
    %v681 = vunpack.c.l.b16 %v607
    %v682 = vunpack.c.h.b16 %v607
    %v683 = vunpack.c.l.b16 %v608
    %v684 = vunpack.c.h.b16 %v608
    %v685 = vunpack.c.l.b16 %v609
    %v686 = vunpack.c.h.b16 %v609
    %v687 = vunpack.c.l.b16 %v610
    %v688 = vunpack.c.h.b16 %v610
    %v689 = vunpack.c.l.b16 %v611
    %v690 = vunpack.c.h.b16 %v611
    %v691 = vunpack.c.l.b16 %v612
    %v692 = vunpack.c.h.b16 %v612
    %v693 = vunpack.c.l.b16 %v613
    %v694 = vunpack.c.h.b16 %v613
    %v695 = vunpack.c.l.b16 %v614
    %v696 = vunpack.c.h.b16 %v614
    %v697 = vunpack.c.l.b16 %v615
    %v698 = vunpack.c.h.b16 %v615
    %v699 = vunpack.c.l.b16 %v616
    %v700 = vunpack.c.h.b16 %v616
    %v701 = vunpack.c.l.b16 %v617
    %v702 = vunpack.c.h.b16 %v617
    %v703 = vunpack.c.l.b16 %v618
    %v704 = vunpack.c.h.b16 %v618
    %v705 = vunpack.c.l.b16 %v619
    %v706 = vunpack.c.h.b16 %v619
    %v707 = vunpack.c.l.b16 %v620
    %v708 = vunpack.c.h.b16 %v620
    %v709 = vunpack.c.l.b16 %v621
    %v710 = vunpack.c.h.b16 %v621
    %v711 = vunpack.c.l.b16 %v622
    %v712 = vunpack.c.h.b16 %v622
    %v713 = vunpack.c.l.b16 %v623
    %v714 = vunpack.c.h.b16 %v623
    %v715 = vunpack.c.l.b16 %v624
    %v716 = vunpack.c.h.b16 %v624
    %v717 = vunpack.c.l.b16 %v625
    %v718 = vunpack.c.h.b16 %v625
    %v719 = vunpack.c.l.b16 %v626
    %v720 = vunpack.c.h.b16 %v626
    %v721 = vunpack.c.l.b16 %v627
    %v722 = vunpack.c.h.b16 %v627
    %v723 = vunpack.c.l.b16 %v628
    %v724 = vunpack.c.h.b16 %v628
    %v725 = vpack.c.b16 %v665, %v661
    %v726 = vpack.c.b16 %v666, %v662
    %v727 = vpack.c.b16 %v667, %v663
    %v728 = vpack.c.b16 %v668, %v664
    %v729 = vpack.c.b16 %v673, %v669
    %v730 = vpack.c.b16 %v674, %v670
    %v731 = vpack.c.b16 %v675, %v671
    %v732 = vpack.c.b16 %v676, %v672
    %v733 = vpack.c.b16 %v681, %v677
    %v734 = vpack.c.b16 %v682, %v678
    %v735 = vpack.c.b16 %v683, %v679
    %v736 = vpack.c.b16 %v684, %v680
    %v737 = vpack.c.b16 %v689, %v685
    %v738 = vpack.c.b16 %v690, %v686
    %v739 = vpack.c.b16 %v691, %v687
    %v740 = vpack.c.b16 %v692, %v688
    %v741 = vpack.c.b16 %v697, %v693
    %v742 = vpack.c.b16 %v698, %v694
    %v743 = vpack.c.b16 %v699, %v695
    %v744 = vpack.c.b16 %v700, %v696
    %v745 = vpack.c.b16 %v705, %v701
    %v746 = vpack.c.b16 %v706, %v702
    %v747 = vpack.c.b16 %v707, %v703
    %v748 = vpack.c.b16 %v708, %v704
    %v749 = vpack.c.b16 %v713, %v709
    %v750 = vpack.c.b16 %v714, %v710
    %v751 = vpack.c.b16 %v715, %v711
    %v752 = vpack.c.b16 %v716, %v712
    %v753 = vpack.c.b16 %v721, %v717
    %v754 = vpack.c.b16 %v722, %v718
    %v755 = vpack.c.b16 %v723, %v719
    %v756 = vpack.c.b16 %v724, %v720
    %789 = vmatprep.subr.bf16.mxu0 %v726
    %790 = vmatpush1.bf16.msra.mxu0 %v725
    %791 = vmatprep.subr.bf16.mxu0 %v730
    %792 = vmatpush1.bf16.msra.mxu0 %v729
    %793 = vmatprep.subr.bf16.mxu0 %v734
    %794 = vmatpush1.bf16.msra.mxu0 %v733
    %795 = vmatprep.subr.bf16.mxu0 %v738
    %796 = vmatpush1.bf16.msra.mxu0 %v737
    %797 = vmatprep.subr.bf16.mxu0 %v742
    %798 = vmatpush1.bf16.msra.mxu0 %v741
    %799 = vmatprep.subr.bf16.mxu0 %v746
    %800 = vmatpush1.bf16.msra.mxu0 %v745
    %801 = vmatprep.subr.bf16.mxu0 %v750
    %802 = vmatpush1.bf16.msra.mxu0 %v749
    %803 = vmatprep.subr.bf16.mxu0 %v754
    %804 = vmatpush1.bf16.msra.mxu0 %v753
    %805 = vmatprep.subr.bf16.mxu0 0
    %806 = vmatpush1.bf16.msra.mxu0 0
    %807 = vmatprep.subr.bf16.mxu0 0
    %808 = vmatpush1.bf16.msra.mxu0 0
    %809 = vmatprep.subr.bf16.mxu0 0
    %810 = vmatpush1.bf16.msra.mxu0 0
    %811 = vmatprep.subr.bf16.mxu0 0
    %812 = vmatpush1.bf16.msra.mxu0 0
    %813 = vmatprep.subr.bf16.mxu0 0
    %814 = vmatpush1.bf16.msra.mxu0 0
    %815 = vmatprep.subr.bf16.mxu0 0
    %816 = vmatpush1.bf16.msra.mxu0 0
    %817 = vmatprep.subr.bf16.mxu0 0
    %818 = vmatpush1.bf16.msra.mxu0 0
    %819 = vmatprep.subr.bf16.mxu0 0
    %820 = vmatpush1.bf16.msra.mxu0 0
    %821 = vmatprep.mubr.bf16.mxu0 0
    %822 = vmatmul.mubr.bf16.gmra.mrb[0].mxu0 %v593
    %v823 = vpop.f32.mrb[0].mxu0
    %v824 = vadd.f32 0.0, %v823
    %v825 = vpop.f32.mrb[0].mxu0
    %v826 = vadd.f32 0.0, %v825
    %v827 = vpop.f32.mrb[0].mxu0
    %v828 = vadd.f32 0.0, %v827
    %v829 = vpop.f32.mrb[0].mxu0
    %v830 = vadd.f32 0.0, %v829
    %831 = vmatprep.mubr.bf16.mxu0 0
    %832 = vmatmul.mubr.bf16.gmra.mrb[0].mxu0 %v594
    %v833 = vpop.f32.mrb[0].mxu0
    %v834 = vadd.f32 0.0, %v833
    %v835 = vpop.f32.mrb[0].mxu0
    %v836 = vadd.f32 0.0, %v835
    %v837 = vpop.f32.mrb[0].mxu0
    %v838 = vadd.f32 0.0, %v837
    %v839 = vpop.f32.mrb[0].mxu0
    %v840 = vadd.f32 0.0, %v839
    %841 = vmatprep.mubr.bf16.mxu0 0
    %842 = vmatmul.mubr.bf16.gmra.mrb[0].mxu0 %v595
    %v843 = vpop.f32.mrb[0].mxu0
    %v844 = vadd.f32 0.0, %v843
    %v845 = vpop.f32.mrb[0].mxu0
    %v846 = vadd.f32 0.0, %v845
    %v847 = vpop.f32.mrb[0].mxu0
    %v848 = vadd.f32 0.0, %v847
    %v849 = vpop.f32.mrb[0].mxu0
    %v850 = vadd.f32 0.0, %v849
    %851 = vmatprep.mubr.bf16.mxu0 0
    %852 = vmatmul.mubr.bf16.gmra.mrb[0].mxu0 %v596
    %v853 = vpop.f32.mrb[0].mxu0
    %v854 = vadd.f32 0.0, %v853
    %v855 = vpop.f32.mrb[0].mxu0
    %v856 = vadd.f32 0.0, %v855
    %v857 = vpop.f32.mrb[0].mxu0
    %v858 = vadd.f32 0.0, %v857
    %v859 = vpop.f32.mrb[0].mxu0
    %v860 = vadd.f32 0.0, %v859
    %861 = vdwg.mxu0
    %862 = vmatprep.subr.bf16.mxu0 %v728
    %863 = vmatpush1.bf16.msra.mxu0 %v727
    %864 = vmatprep.subr.bf16.mxu0 %v732
    %865 = vmatpush1.bf16.msra.mxu0 %v731
    %866 = vmatprep.subr.bf16.mxu0 %v736
    %867 = vmatpush1.bf16.msra.mxu0 %v735
    %868 = vmatprep.subr.bf16.mxu0 %v740
    %869 = vmatpush1.bf16.msra.mxu0 %v739
    %870 = vmatprep.subr.bf16.mxu0 %v744
    %871 = vmatpush1.bf16.msra.mxu0 %v743
    %872 = vmatprep.subr.bf16.mxu0 %v748
    %873 = vmatpush1.bf16.msra.mxu0 %v747
    %874 = vmatprep.subr.bf16.mxu0 %v752
    %875 = vmatpush1.bf16.msra.mxu0 %v751
    %876 = vmatprep.subr.bf16.mxu0 %v756
    %877 = vmatpush1.bf16.msra.mxu0 %v755
    %878 = vmatprep.subr.bf16.mxu0 0
    %879 = vmatpush1.bf16.msra.mxu0 0
    %880 = vmatprep.subr.bf16.mxu0 0
    %881 = vmatpush1.bf16.msra.mxu0 0
    %882 = vmatprep.subr.bf16.mxu0 0
    %883 = vmatpush1.bf16.msra.mxu0 0
    %884 = vmatprep.subr.bf16.mxu0 0
    %885 = vmatpush1.bf16.msra.mxu0 0
    %886 = vmatprep.subr.bf16.mxu0 0
    %887 = vmatpush1.bf16.msra.mxu0 0
    %888 = vmatprep.subr.bf16.mxu0 0
    %889 = vmatpush1.bf16.msra.mxu0 0
    %890 = vmatprep.subr.bf16.mxu0 0
    %891 = vmatpush1.bf16.msra.mxu0 0
    %892 = vmatprep.subr.bf16.mxu0 0
    %893 = vmatpush1.bf16.msra.mxu0 0
    %894 = vmatprep.mubr.bf16.mxu0 0
    %895 = vmatmul.mubr.bf16.gmra.mrb[0].mxu0 %v593
    %v896 = vpop.f32.mrb[0].mxu0
    %v897 = vadd.f32 0.0, %v896
    %v898 = vpop.f32.mrb[0].mxu0
    %v899 = vadd.f32 0.0, %v898
    %v900 = vpop.f32.mrb[0].mxu0
    %v901 = vadd.f32 0.0, %v900
    %v902 = vpop.f32.mrb[0].mxu0
    %v903 = vadd.f32 0.0, %v902
    %904 = vmatprep.mubr.bf16.mxu0 0
    %905 = vmatmul.mubr.bf16.gmra.mrb[0].mxu0 %v594
    %v906 = vpop.f32.mrb[0].mxu0
    %v907 = vadd.f32 0.0, %v906
    %v908 = vpop.f32.mrb[0].mxu0
    %v909 = vadd.f32 0.0, %v908
    %v910 = vpop.f32.mrb[0].mxu0
    %v911 = vadd.f32 0.0, %v910
    %v912 = vpop.f32.mrb[0].mxu0
    %v913 = vadd.f32 0.0, %v912
    %914 = vmatprep.mubr.bf16.mxu0 0
    %915 = vmatmul.mubr.bf16.gmra.mrb[0].mxu0 %v595
    %v916 = vpop.f32.mrb[0].mxu0
    %v917 = vadd.f32 0.0, %v916
    %v918 = vpop.f32.mrb[0].mxu0
    %v919 = vadd.f32 0.0, %v918
    %v920 = vpop.f32.mrb[0].mxu0
    %v921 = vadd.f32 0.0, %v920
    %v922 = vpop.f32.mrb[0].mxu0
    %v923 = vadd.f32 0.0, %v922
    %924 = vmatprep.mubr.bf16.mxu0 0
    %925 = vmatmul.mubr.bf16.gmra.mrb[0].mxu0 %v596
    %v926 = vpop.f32.mrb[0].mxu0
    %v927 = vadd.f32 0.0, %v926
    %v928 = vpop.f32.mrb[0].mxu0
    %v929 = vadd.f32 0.0, %v928
    %v930 = vpop.f32.mrb[0].mxu0
    %v931 = vadd.f32 0.0, %v930
    %v932 = vpop.f32.mrb[0].mxu0
    %v933 = vadd.f32 0.0, %v932
    %934 = vdwg.mxu0
    %935 = vst [vmem:[#allocation2] sm:$0xff] %v824
    %936 = vst [vmem:[#allocation2 + $0x8] sm:$0xff] %v826
    %937 = vst [vmem:[#allocation2 + $0x10] sm:$0xff] %v897
    %938 = vst [vmem:[#allocation2 + $0x18] sm:$0xff] %v899
    %939 = vst [vmem:[#allocation2 + $0x20] sm:$0xff] %v828
    %940 = vst [vmem:[#allocation2 + $0x28] sm:$0xff] %v830
    %941 = vst [vmem:[#allocation2 + $0x30] sm:$0xff] %v901
    %942 = vst [vmem:[#allocation2 + $0x38] sm:$0xff] %v903
    %943 = vst [vmem:[#allocation2 + $0x40] sm:$0xff] %v834
    %944 = vst [vmem:[#allocation2 + $0x48] sm:$0xff] %v836
    %945 = vst [vmem:[#allocation2 + $0x50] sm:$0xff] %v907
    %946 = vst [vmem:[#allocation2 + $0x58] sm:$0xff] %v909
    %947 = vst [vmem:[#allocation2 + $0x60] sm:$0xff] %v838
    %948 = vst [vmem:[#allocation2 + $0x68] sm:$0xff] %v840
    %949 = vst [vmem:[#allocation2 + $0x70] sm:$0xff] %v911
    %950 = vst [vmem:[#allocation2 + $0x78] sm:$0xff] %v913
    %951 = vst [vmem:[#allocation2 + $0x80] sm:$0xff] %v844
    %952 = vst [vmem:[#allocation2 + $0x88] sm:$0xff] %v846
    %953 = vst [vmem:[#allocation2 + $0x90] sm:$0xff] %v917
    %954 = vst [vmem:[#allocation2 + $0x98] sm:$0xff] %v919
    %955 = vst [vmem:[#allocation2 + $0xa0] sm:$0xff] %v848
    %956 = vst [vmem:[#allocation2 + $0xa8] sm:$0xff] %v850
    %957 = vst [vmem:[#allocation2 + $0xb0] sm:$0xff] %v921
    %958 = vst [vmem:[#allocation2 + $0xb8] sm:$0xff] %v923
    %959 = vst [vmem:[#allocation2 + $0xc0] sm:$0xff] %v854
    %960 = vst [vmem:[#allocation2 + $0xc8] sm:$0xff] %v856
    %961 = vst [vmem:[#allocation2 + $0xd0] sm:$0xff] %v927
    %962 = vst [vmem:[#allocation2 + $0xd8] sm:$0xff] %v929
    %963 = vst [vmem:[#allocation2 + $0xe0] sm:$0xff] %v858
    %964 = vst [vmem:[#allocation2 + $0xe8] sm:$0xff] %v860
    %965 = vst [vmem:[#allocation2 + $0xf0] sm:$0xff] %v931
    %966 = vst [vmem:[#allocation2 + $0xf8] sm:$0xff] %v933
    %s967 = scalar_lea.vmem [#allocation11], 256
    %v968 = vld [vmem:[%s967] sm:$0xff]
    %v969 = vld [vmem:[%s967 + $0x8] sm:$0xff]
    %v970 = vld [vmem:[%s967 + $0x10] sm:$0xff]
    %v971 = vld [vmem:[%s967 + $0x18] sm:$0xff]
    %v972 = vld [vmem:[%s967 + $0x20] sm:$0xff]
    %v973 = vld [vmem:[%s967 + $0x28] sm:$0xff]
    %v974 = vld [vmem:[%s967 + $0x30] sm:$0xff]
    %v975 = vld [vmem:[%s967 + $0x38] sm:$0xff]
    %v976 = vld [vmem:[%s967 + $0x40] sm:$0xff]
    %v977 = vld [vmem:[%s967 + $0x48] sm:$0xff]
    %v978 = vld [vmem:[%s967 + $0x50] sm:$0xff]
    %v979 = vld [vmem:[%s967 + $0x58] sm:$0xff]
    %v980 = vld [vmem:[%s967 + $0x60] sm:$0xff]
    %v981 = vld [vmem:[%s967 + $0x68] sm:$0xff]
    %v982 = vld [vmem:[%s967 + $0x70] sm:$0xff]
    %v983 = vld [vmem:[%s967 + $0x78] sm:$0xff]
    %v984 = vld [vmem:[%s967 + $0x80] sm:$0xff]
    %v985 = vld [vmem:[%s967 + $0x88] sm:$0xff]
    %v986 = vld [vmem:[%s967 + $0x90] sm:$0xff]
    %v987 = vld [vmem:[%s967 + $0x98] sm:$0xff]
    %v988 = vld [vmem:[%s967 + $0xa0] sm:$0xff]
    %v989 = vld [vmem:[%s967 + $0xa8] sm:$0xff]
    %v990 = vld [vmem:[%s967 + $0xb0] sm:$0xff]
    %v991 = vld [vmem:[%s967 + $0xb8] sm:$0xff]
    %v992 = vld [vmem:[%s967 + $0xc0] sm:$0xff]
    %v993 = vld [vmem:[%s967 + $0xc8] sm:$0xff]
    %v994 = vld [vmem:[%s967 + $0xd0] sm:$0xff]
    %v995 = vld [vmem:[%s967 + $0xd8] sm:$0xff]
    %v996 = vld [vmem:[%s967 + $0xe0] sm:$0xff]
    %v997 = vld [vmem:[%s967 + $0xe8] sm:$0xff]
    %v998 = vld [vmem:[%s967 + $0xf0] sm:$0xff]
    %v999 = vld [vmem:[%s967 + $0xf8] sm:$0xff]
    %v1000 = vld [vmem:[#allocation2] sm:$0xff]
    %v1001 = vld [vmem:[#allocation2 + $0x10] sm:$0xff]
    %v1002 = vld [vmem:[#allocation2 + $0x18] sm:$0xff]
    %v1003 = vxor.u32 %v1000, 2147483648
    %v1004 = vmul.f32 %v1003, 1.442695
    %v1005 = vpow.pop %v1004
    %v1006 = vadd.f32 %v1005, 1.0
    %v1007 = vrcp.pop %v1006
    %v1008 = vmul.f32 1.0, %v1007
    %v1009 = vtanh.pop %v1001
    %v1010 = vxor.u32 %v1002, 2147483648
    %v1011 = vmul.f32 %v1010, 1.442695
    %v1012 = vpow.pop %v1011
    %v1013 = vadd.f32 %v1012, 1.0
    %v1014 = vrcp.pop %v1013
    %v1015 = vmul.f32 1.0, %v1014
    %v1016 = vmul.f32 %v1008, %v1009
    %v1017 = vtanh.pop %v1016
    %v1018 = vmul.f32 %v1015, %v1017
    %v1019 = vld [vmem:[#allocation2 + $0x20] sm:$0xff]
    %v1020 = vld [vmem:[#allocation2 + $0x28] sm:$0xff]
    %v1021 = vld [vmem:[#allocation2 + $0x30] sm:$0xff]
    %v1022 = vld [vmem:[#allocation2 + $0x38] sm:$0xff]
    %v1023 = vpack.c.bf16 %v1018, %v1018
    %v1056 = vunpack.c.l.b16 %v968
    %v1057 = vunpack.c.h.b16 %v968
    %v1058 = vunpack.c.l.b16 %v969
    %v1059 = vunpack.c.h.b16 %v969
    %v1060 = vunpack.c.l.b16 %v970
    %v1061 = vunpack.c.h.b16 %v970
    %v1062 = vunpack.c.l.b16 %v971
    %v1063 = vunpack.c.h.b16 %v971
    %v1064 = vunpack.c.l.b16 %v972
    %v1065 = vunpack.c.h.b16 %v972
    %v1066 = vunpack.c.l.b16 %v973
    %v1067 = vunpack.c.h.b16 %v973
    %v1068 = vunpack.c.l.b16 %v974
    %v1069 = vunpack.c.h.b16 %v974
    %v1070 = vunpack.c.l.b16 %v975
    %v1071 = vunpack.c.h.b16 %v975
    %v1072 = vunpack.c.l.b16 %v976
    %v1073 = vunpack.c.h.b16 %v976
    %v1074 = vunpack.c.l.b16 %v977
    %v1075 = vunpack.c.h.b16 %v977
    %v1076 = vunpack.c.l.b16 %v978
    %v1077 = vunpack.c.h.b16 %v978
    %v1078 = vunpack.c.l.b16 %v979
    %v1079 = vunpack.c.h.b16 %v979
    %v1080 = vunpack.c.l.b16 %v980
    %v1081 = vunpack.c.h.b16 %v980
    %v1082 = vunpack.c.l.b16 %v981
    %v1083 = vunpack.c.h.b16 %v981
    %v1084 = vunpack.c.l.b16 %v982
    %v1085 = vunpack.c.h.b16 %v982
    %v1086 = vunpack.c.l.b16 %v983
    %v1087 = vunpack.c.h.b16 %v983
    %v1088 = vunpack.c.l.b16 %v984
    %v1089 = vunpack.c.h.b16 %v984
    %v1090 = vunpack.c.l.b16 %v985
    %v1091 = vunpack.c.h.b16 %v985
    %v1092 = vunpack.c.l.b16 %v986
    %v1093 = vunpack.c.h.b16 %v986
    %v1094 = vunpack.c.l.b16 %v987
    %v1095 = vunpack.c.h.b16 %v987
    %v1096 = vunpack.c.l.b16 %v988
    %v1097 = vunpack.c.h.b16 %v988
    %v1098 = vunpack.c.l.b16 %v989
    %v1099 = vunpack.c.h.b16 %v989
    %v1100 = vunpack.c.l.b16 %v990
    %v1101 = vunpack.c.h.b16 %v990
    %v1102 = vunpack.c.l.b16 %v991
    %v1103 = vunpack.c.h.b16 %v991
    %v1104 = vunpack.c.l.b16 %v992
    %v1105 = vunpack.c.h.b16 %v992
    %v1106 = vunpack.c.l.b16 %v993
    %v1107 = vunpack.c.h.b16 %v993
    %v1108 = vunpack.c.l.b16 %v994
    %v1109 = vunpack.c.h.b16 %v994
    %v1110 = vunpack.c.l.b16 %v995
    %v1111 = vunpack.c.h.b16 %v995
    %v1112 = vunpack.c.l.b16 %v996
    %v1113 = vunpack.c.h.b16 %v996
    %v1114 = vunpack.c.l.b16 %v997
    %v1115 = vunpack.c.h.b16 %v997
    %v1116 = vunpack.c.l.b16 %v998
    %v1117 = vunpack.c.h.b16 %v998
    %v1118 = vunpack.c.l.b16 %v999
    %v1119 = vunpack.c.h.b16 %v999
    %v1120 = vpack.c.b16 %v1060, %v1056
    %v1121 = vpack.c.b16 %v1061, %v1057
    %v1122 = vpack.c.b16 %v1062, %v1058
    %v1123 = vpack.c.b16 %v1063, %v1059
    %v1124 = vpack.c.b16 %v1068, %v1064
    %v1125 = vpack.c.b16 %v1069, %v1065
    %v1126 = vpack.c.b16 %v1070, %v1066
    %v1127 = vpack.c.b16 %v1071, %v1067
    %v1128 = vpack.c.b16 %v1076, %v1072
    %v1129 = vpack.c.b16 %v1077, %v1073
    %v1130 = vpack.c.b16 %v1078, %v1074
    %v1131 = vpack.c.b16 %v1079, %v1075
    %v1132 = vpack.c.b16 %v1084, %v1080
    %v1133 = vpack.c.b16 %v1085, %v1081
    %v1134 = vpack.c.b16 %v1086, %v1082
    %v1135 = vpack.c.b16 %v1087, %v1083
    %v1136 = vpack.c.b16 %v1092, %v1088
    %v1137 = vpack.c.b16 %v1093, %v1089
    %v1138 = vpack.c.b16 %v1094, %v1090
    %v1139 = vpack.c.b16 %v1095, %v1091
    %v1140 = vpack.c.b16 %v1100, %v1096
    %v1141 = vpack.c.b16 %v1101, %v1097
    %v1142 = vpack.c.b16 %v1102, %v1098
    %v1143 = vpack.c.b16 %v1103, %v1099
    %v1144 = vpack.c.b16 %v1108, %v1104
    %v1145 = vpack.c.b16 %v1109, %v1105
    %v1146 = vpack.c.b16 %v1110, %v1106
    %v1147 = vpack.c.b16 %v1111, %v1107
    %v1148 = vpack.c.b16 %v1116, %v1112
    %v1149 = vpack.c.b16 %v1117, %v1113
    %v1150 = vpack.c.b16 %v1118, %v1114
    %v1151 = vpack.c.b16 %v1119, %v1115
    %1184 = vmatprep.subr.bf16.mxu0 %v1121
    %1185 = vmatpush1.bf16.msra.mxu0 %v1120
    %1186 = vmatprep.subr.bf16.mxu0 %v1125
    %1187 = vmatpush1.bf16.msra.mxu0 %v1124
    %1188 = vmatprep.subr.bf16.mxu0 %v1129
    %1189 = vmatpush1.bf16.msra.mxu0 %v1128
    %1190 = vmatprep.subr.bf16.mxu0 %v1133
    %1191 = vmatpush1.bf16.msra.mxu0 %v1132
    %1192 = vmatprep.subr.bf16.mxu0 %v1137
    %1193 = vmatpush1.bf16.msra.mxu0 %v1136
    %1194 = vmatprep.subr.bf16.mxu0 %v1141
    %1195 = vmatpush1.bf16.msra.mxu0 %v1140
    %1196 = vmatprep.subr.bf16.mxu0 %v1145
    %1197 = vmatpush1.bf16.msra.mxu0 %v1144
    %1198 = vmatprep.subr.bf16.mxu0 %v1149
    %1199 = vmatpush1.bf16.msra.mxu0 %v1148
    %1200 = vmatprep.subr.bf16.mxu0 0
    %1201 = vmatpush1.bf16.msra.mxu0 0
    %1202 = vmatprep.subr.bf16.mxu0 0
    %1203 = vmatpush1.bf16.msra.mxu0 0
    %1204 = vmatprep.subr.bf16.mxu0 0
    %1205 = vmatpush1.bf16.msra.mxu0 0
    %1206 = vmatprep.subr.bf16.mxu0 0
    %1207 = vmatpush1.bf16.msra.mxu0 0
    %1208 = vmatprep.subr.bf16.mxu0 0
    %1209 = vmatpush1.bf16.msra.mxu0 0
    %1210 = vmatprep.subr.bf16.mxu0 0
    %1211 = vmatpush1.bf16.msra.mxu0 0
    %1212 = vmatprep.subr.bf16.mxu0 0
    %1213 = vmatpush1.bf16.msra.mxu0 0
    %1214 = vmatprep.subr.bf16.mxu0 0
    %1215 = vmatpush1.bf16.msra.mxu0 0
    %1216 = vmatprep.mubr.bf16.mxu0 0
    %1217 = vmatmul.mubr.bf16.gmra.mrb[0].mxu0 %v1023
    %v1218 = vpop.f32.mrb[0].mxu0
    %v1219 = vadd.f32 0.0, %v1218
    %v1220 = vpop.f32.mrb[0].mxu0
    %v1221 = vadd.f32 0.0, %v1220
    %v1222 = vpop.f32.mrb[0].mxu0
    %v1223 = vpop.f32.mrb[0].mxu0
    %1224 = vdwg.mxu0
    %1225 = vmatprep.subr.bf16.mxu0 %v1123
    %1226 = vmatpush1.bf16.msra.mxu0 %v1122
    %1227 = vmatprep.subr.bf16.mxu0 %v1127
    %1228 = vmatpush1.bf16.msra.mxu0 %v1126
    %1229 = vmatprep.subr.bf16.mxu0 %v1131
    %1230 = vmatpush1.bf16.msra.mxu0 %v1130
    %1231 = vmatprep.subr.bf16.mxu0 %v1135
    %1232 = vmatpush1.bf16.msra.mxu0 %v1134
    %1233 = vmatprep.subr.bf16.mxu0 %v1139
    %1234 = vmatpush1.bf16.msra.mxu0 %v1138
    %1235 = vmatprep.subr.bf16.mxu0 %v1143
    %1236 = vmatpush1.bf16.msra.mxu0 %v1142
    %1237 = vmatprep.subr.bf16.mxu0 %v1147
    %1238 = vmatpush1.bf16.msra.mxu0 %v1146
    %1239 = vmatprep.subr.bf16.mxu0 %v1151
    %1240 = vmatpush1.bf16.msra.mxu0 %v1150
    %1241 = vmatprep.subr.bf16.mxu0 0
    %1242 = vmatpush1.bf16.msra.mxu0 0
    %1243 = vmatprep.subr.bf16.mxu0 0
    %1244 = vmatpush1.bf16.msra.mxu0 0
    %1245 = vmatprep.subr.bf16.mxu0 0
    %1246 = vmatpush1.bf16.msra.mxu0 0
    %1247 = vmatprep.subr.bf16.mxu0 0
    %1248 = vmatpush1.bf16.msra.mxu0 0
    %1249 = vmatprep.subr.bf16.mxu0 0
    %1250 = vmatpush1.bf16.msra.mxu0 0
    %1251 = vmatprep.subr.bf16.mxu0 0
    %1252 = vmatpush1.bf16.msra.mxu0 0
    %1253 = vmatprep.subr.bf16.mxu0 0
    %1254 = vmatpush1.bf16.msra.mxu0 0
    %1255 = vmatprep.subr.bf16.mxu0 0
    %1256 = vmatpush1.bf16.msra.mxu0 0
    %1257 = vmatprep.mubr.bf16.mxu0 0
    %1258 = vmatmul.mubr.bf16.gmra.mrb[0].mxu0 %v1023
    %v1259 = vpop.f32.mrb[0].mxu0
    %v1260 = vadd.f32 0.0, %v1259
    %v1261 = vpop.f32.mrb[0].mxu0
    %v1262 = vadd.f32 0.0, %v1261
    %v1263 = vpop.f32.mrb[0].mxu0
    %v1264 = vpop.f32.mrb[0].mxu0
    %1265 = vdwg.mxu0
    %v1266 = vadd.f32 %v1019, %v1219
    %v1267 = vadd.f32 %v1020, %v1221
    %v1268 = vadd.f32 %v1021, %v1260
    %v1269 = vadd.f32 %v1022, %v1262
    %v1270 = vxor.u32 %v1266, 2147483648
    %v1271 = vmul.f32 %v1270, 1.442695
    %v1272 = vpow.pop %v1271
    %v1273 = vadd.f32 %v1272, 1.0
    %v1274 = vrcp.pop %v1273
    %v1275 = vmul.f32 1.0, %v1274
    %v1276 = vxor.u32 %v1267, 2147483648
    %v1277 = vmul.f32 %v1276, 1.442695
    %v1278 = vpow.pop %v1277
    %v1279 = vadd.f32 %v1278, 1.0
    %v1280 = vrcp.pop %v1279
    %v1281 = vmul.f32 1.0, %v1280
    %v1282 = vtanh.pop %v1268
    %v1283 = vxor.u32 %v1269, 2147483648
    %v1284 = vmul.f32 %v1283, 1.442695
    %v1285 = vpow.pop %v1284
    %v1286 = vadd.f32 %v1285, 1.0
    %v1287 = vrcp.pop %v1286
    %v1288 = vmul.f32 1.0, %v1287
    %v1289 = vmul.f32 %v1281, %v1016
    %v1290 = vmul.f32 %v1275, %v1282
    %v1291 = vadd.f32 %v1289, %v1290
    %v1292 = vtanh.pop %v1291
    %v1293 = vmul.f32 %v1288, %v1292
    %v1294 = vld [vmem:[#allocation2 + $0x40] sm:$0xff]
    %v1295 = vld [vmem:[#allocation2 + $0x48] sm:$0xff]
    %v1296 = vld [vmem:[#allocation2 + $0x50] sm:$0xff]
    %v1297 = vld [vmem:[#allocation2 + $0x58] sm:$0xff]
    %v1298 = vpack.c.bf16 %v1293, %v1293
    %1299 = vmatprep.subr.bf16.mxu0 %v1121
    %1300 = vmatpush1.bf16.msra.mxu0 %v1120
    %1301 = vmatprep.subr.bf16.mxu0 %v1125
    %1302 = vmatpush1.bf16.msra.mxu0 %v1124
    %1303 = vmatprep.subr.bf16.mxu0 %v1129
    %1304 = vmatpush1.bf16.msra.mxu0 %v1128
    %1305 = vmatprep.subr.bf16.mxu0 %v1133
    %1306 = vmatpush1.bf16.msra.mxu0 %v1132
    %1307 = vmatprep.subr.bf16.mxu0 %v1137
    %1308 = vmatpush1.bf16.msra.mxu0 %v1136
    %1309 = vmatprep.subr.bf16.mxu0 %v1141
    %1310 = vmatpush1.bf16.msra.mxu0 %v1140
    %1311 = vmatprep.subr.bf16.mxu0 %v1145
    %1312 = vmatpush1.bf16.msra.mxu0 %v1144
    %1313 = vmatprep.subr.bf16.mxu0 %v1149
    %1314 = vmatpush1.bf16.msra.mxu0 %v1148
    %1315 = vmatprep.subr.bf16.mxu0 0
    %1316 = vmatpush1.bf16.msra.mxu0 0
    %1317 = vmatprep.subr.bf16.mxu0 0
    %1318 = vmatpush1.bf16.msra.mxu0 0
    %1319 = vmatprep.subr.bf16.mxu0 0
    %1320 = vmatpush1.bf16.msra.mxu0 0
    %1321 = vmatprep.subr.bf16.mxu0 0
    %1322 = vmatpush1.bf16.msra.mxu0 0
    %1323 = vmatprep.subr.bf16.mxu0 0
    %1324 = vmatpush1.bf16.msra.mxu0 0
    %1325 = vmatprep.subr.bf16.mxu0 0
    %1326 = vmatpush1.bf16.msra.mxu0 0
    %1327 = vmatprep.subr.bf16.mxu0 0
    %1328 = vmatpush1.bf16.msra.mxu0 0
    %1329 = vmatprep.subr.bf16.mxu0 0
    %1330 = vmatpush1.bf16.msra.mxu0 0
    %1331 = vmatprep.mubr.bf16.mxu0 0
    %1332 = vmatmul.mubr.bf16.gmra.mrb[0].mxu0 %v1298
    %v1333 = vpop.f32.mrb[0].mxu0
    %v1334 = vadd.f32 0.0, %v1333
    %v1335 = vpop.f32.mrb[0].mxu0
    %v1336 = vadd.f32 0.0, %v1335
    %v1337 = vpop.f32.mrb[0].mxu0
    %v1338 = vpop.f32.mrb[0].mxu0
    %1339 = vdwg.mxu0
    %1340 = vmatprep.subr.bf16.mxu0 %v1123
    %1341 = vmatpush1.bf16.msra.mxu0 %v1122
    %1342 = vmatprep.subr.bf16.mxu0 %v1127
    %1343 = vmatpush1.bf16.msra.mxu0 %v1126
    %1344 = vmatprep.subr.bf16.mxu0 %v1131
    %1345 = vmatpush1.bf16.msra.mxu0 %v1130
    %1346 = vmatprep.subr.bf16.mxu0 %v1135
    %1347 = vmatpush1.bf16.msra.mxu0 %v1134
    %1348 = vmatprep.subr.bf16.mxu0 %v1139
    %1349 = vmatpush1.bf16.msra.mxu0 %v1138
    %1350 = vmatprep.subr.bf16.mxu0 %v1143
    %1351 = vmatpush1.bf16.msra.mxu0 %v1142
    %1352 = vmatprep.subr.bf16.mxu0 %v1147
    %1353 = vmatpush1.bf16.msra.mxu0 %v1146
    %1354 = vmatprep.subr.bf16.mxu0 %v1151
    %1355 = vmatpush1.bf16.msra.mxu0 %v1150
    %1356 = vmatprep.subr.bf16.mxu0 0
    %1357 = vmatpush1.bf16.msra.mxu0 0
    %1358 = vmatprep.subr.bf16.mxu0 0
    %1359 = vmatpush1.bf16.msra.mxu0 0
    %1360 = vmatprep.subr.bf16.mxu0 0
    %1361 = vmatpush1.bf16.msra.mxu0 0
    %1362 = vmatprep.subr.bf16.mxu0 0
    %1363 = vmatpush1.bf16.msra.mxu0 0
    %1364 = vmatprep.subr.bf16.mxu0 0
    %1365 = vmatpush1.bf16.msra.mxu0 0
    %1366 = vmatprep.subr.bf16.mxu0 0
    %1367 = vmatpush1.bf16.msra.mxu0 0
    %1368 = vmatprep.subr.bf16.mxu0 0
    %1369 = vmatpush1.bf16.msra.mxu0 0
    %1370 = vmatprep.subr.bf16.mxu0 0
    %1371 = vmatpush1.bf16.msra.mxu0 0
    %1372 = vmatprep.mubr.bf16.mxu0 0
    %1373 = vmatmul.mubr.bf16.gmra.mrb[0].mxu0 %v1298
    %v1374 = vpop.f32.mrb[0].mxu0
    %v1375 = vadd.f32 0.0, %v1374
    %v1376 = vpop.f32.mrb[0].mxu0
    %v1377 = vadd.f32 0.0, %v1376
    %v1378 = vpop.f32.mrb[0].mxu0
    %v1379 = vpop.f32.mrb[0].mxu0
    %1380 = vdwg.mxu0
    %v1381 = vadd.f32 %v1294, %v1334
    %v1382 = vadd.f32 %v1295, %v1336
    %v1383 = vadd.f32 %v1296, %v1375
    %v1384 = vadd.f32 %v1297, %v1377
    %v1385 = vxor.u32 %v1381, 2147483648
    %v1386 = vmul.f32 %v1385, 1.442695
    %v1387 = vpow.pop %v1386
    %v1388 = vadd.f32 %v1387, 1.0
    %v1389 = vrcp.pop %v1388
    %v1390 = vmul.f32 1.0, %v1389
    %v1391 = vxor.u32 %v1382, 2147483648
    %v1392 = vmul.f32 %v1391, 1.442695
    %v1393 = vpow.pop %v1392
    %v1394 = vadd.f32 %v1393, 1.0
    %v1395 = vrcp.pop %v1394
    %v1396 = vmul.f32 1.0, %v1395
    %v1397 = vtanh.pop %v1383
    %v1398 = vxor.u32 %v1384, 2147483648
    %v1399 = vmul.f32 %v1398, 1.442695
    %v1400 = vpow.pop %v1399
    %v1401 = vadd.f32 %v1400, 1.0
    %v1402 = vrcp.pop %v1401
    %v1403 = vmul.f32 1.0, %v1402
    %v1404 = vmul.f32 %v1396, %v1291
    %v1405 = vmul.f32 %v1390, %v1397
    %v1406 = vadd.f32 %v1404, %v1405
    %v1407 = vtanh.pop %v1406
    %v1408 = vmul.f32 %v1403, %v1407
    %v1409 = vld [vmem:[#allocation2 + $0x60] sm:$0xff]
    %v1410 = vld [vmem:[#allocation2 + $0x68] sm:$0xff]
    %v1411 = vld [vmem:[#allocation2 + $0x70] sm:$0xff]
    %v1412 = vld [vmem:[#allocation2 + $0x78] sm:$0xff]
    %v1413 = vpack.c.bf16 %v1408, %v1408
    %1414 = vmatprep.subr.bf16.mxu0 %v1121
    %1415 = vmatpush1.bf16.msra.mxu0 %v1120
    %1416 = vmatprep.subr.bf16.mxu0 %v1125
    %1417 = vmatpush1.bf16.msra.mxu0 %v1124
    %1418 = vmatprep.subr.bf16.mxu0 %v1129
    %1419 = vmatpush1.bf16.msra.mxu0 %v1128
    %1420 = vmatprep.subr.bf16.mxu0 %v1133
    %1421 = vmatpush1.bf16.msra.mxu0 %v1132
    %1422 = vmatprep.subr.bf16.mxu0 %v1137
    %1423 = vmatpush1.bf16.msra.mxu0 %v1136
    %1424 = vmatprep.subr.bf16.mxu0 %v1141
    %1425 = vmatpush1.bf16.msra.mxu0 %v1140
    %1426 = vmatprep.subr.bf16.mxu0 %v1145
    %1427 = vmatpush1.bf16.msra.mxu0 %v1144
    %1428 = vmatprep.subr.bf16.mxu0 %v1149
    %1429 = vmatpush1.bf16.msra.mxu0 %v1148
    %1430 = vmatprep.subr.bf16.mxu0 0
    %1431 = vmatpush1.bf16.msra.mxu0 0
    %1432 = vmatprep.subr.bf16.mxu0 0
    %1433 = vmatpush1.bf16.msra.mxu0 0
    %1434 = vmatprep.subr.bf16.mxu0 0
    %1435 = vmatpush1.bf16.msra.mxu0 0
    %1436 = vmatprep.subr.bf16.mxu0 0
    %1437 = vmatpush1.bf16.msra.mxu0 0
    %1438 = vmatprep.subr.bf16.mxu0 0
    %1439 = vmatpush1.bf16.msra.mxu0 0
    %1440 = vmatprep.subr.bf16.mxu0 0
    %1441 = vmatpush1.bf16.msra.mxu0 0
    %1442 = vmatprep.subr.bf16.mxu0 0
    %1443 = vmatpush1.bf16.msra.mxu0 0
    %1444 = vmatprep.subr.bf16.mxu0 0
    %1445 = vmatpush1.bf16.msra.mxu0 0
    %1446 = vmatprep.mubr.bf16.mxu0 0
    %1447 = vmatmul.mubr.bf16.gmra.mrb[0].mxu0 %v1413
    %v1448 = vpop.f32.mrb[0].mxu0
    %v1449 = vadd.f32 0.0, %v1448
    %v1450 = vpop.f32.mrb[0].mxu0
    %v1451 = vadd.f32 0.0, %v1450
    %v1452 = vpop.f32.mrb[0].mxu0
    %v1453 = vpop.f32.mrb[0].mxu0
    %1454 = vdwg.mxu0
    %1455 = vmatprep.subr.bf16.mxu0 %v1123
    %1456 = vmatpush1.bf16.msra.mxu0 %v1122
    %1457 = vmatprep.subr.bf16.mxu0 %v1127
    %1458 = vmatpush1.bf16.msra.mxu0 %v1126
    %1459 = vmatprep.subr.bf16.mxu0 %v1131
    %1460 = vmatpush1.bf16.msra.mxu0 %v1130
    %1461 = vmatprep.subr.bf16.mxu0 %v1135
    %1462 = vmatpush1.bf16.msra.mxu0 %v1134
    %1463 = vmatprep.subr.bf16.mxu0 %v1139
    %1464 = vmatpush1.bf16.msra.mxu0 %v1138
    %1465 = vmatprep.subr.bf16.mxu0 %v1143
    %1466 = vmatpush1.bf16.msra.mxu0 %v1142
    %1467 = vmatprep.subr.bf16.mxu0 %v1147
    %1468 = vmatpush1.bf16.msra.mxu0 %v1146
    %1469 = vmatprep.subr.bf16.mxu0 %v1151
    %1470 = vmatpush1.bf16.msra.mxu0 %v1150
    %1471 = vmatprep.subr.bf16.mxu0 0
    %1472 = vmatpush1.bf16.msra.mxu0 0
    %1473 = vmatprep.subr.bf16.mxu0 0
    %1474 = vmatpush1.bf16.msra.mxu0 0
    %1475 = vmatprep.subr.bf16.mxu0 0
    %1476 = vmatpush1.bf16.msra.mxu0 0
    %1477 = vmatprep.subr.bf16.mxu0 0
    %1478 = vmatpush1.bf16.msra.mxu0 0
    %1479 = vmatprep.subr.bf16.mxu0 0
    %1480 = vmatpush1.bf16.msra.mxu0 0
    %1481 = vmatprep.subr.bf16.mxu0 0
    %1482 = vmatpush1.bf16.msra.mxu0 0
    %1483 = vmatprep.subr.bf16.mxu0 0
    %1484 = vmatpush1.bf16.msra.mxu0 0
    %1485 = vmatprep.subr.bf16.mxu0 0
    %1486 = vmatpush1.bf16.msra.mxu0 0
    %1487 = vmatprep.mubr.bf16.mxu0 0
    %1488 = vmatmul.mubr.bf16.gmra.mrb[0].mxu0 %v1413
    %v1489 = vpop.f32.mrb[0].mxu0
    %v1490 = vadd.f32 0.0, %v1489
    %v1491 = vpop.f32.mrb[0].mxu0
    %v1492 = vadd.f32 0.0, %v1491
    %v1493 = vpop.f32.mrb[0].mxu0
    %v1494 = vpop.f32.mrb[0].mxu0
    %1495 = vdwg.mxu0
    %v1496 = vadd.f32 %v1409, %v1449
    %v1497 = vadd.f32 %v1410, %v1451
    %v1498 = vadd.f32 %v1411, %v1490
    %v1499 = vadd.f32 %v1412, %v1492
    %v1500 = vxor.u32 %v1496, 2147483648
    %v1501 = vmul.f32 %v1500, 1.442695
    %v1502 = vpow.pop %v1501
    %v1503 = vadd.f32 %v1502, 1.0
    %v1504 = vrcp.pop %v1503
    %v1505 = vmul.f32 1.0, %v1504
    %v1506 = vxor.u32 %v1497, 2147483648
    %v1507 = vmul.f32 %v1506, 1.442695
    %v1508 = vpow.pop %v1507
    %v1509 = vadd.f32 %v1508, 1.0
    %v1510 = vrcp.pop %v1509
    %v1511 = vmul.f32 1.0, %v1510
    %v1512 = vtanh.pop %v1498
    %v1513 = vxor.u32 %v1499, 2147483648
    %v1514 = vmul.f32 %v1513, 1.442695
    %v1515 = vpow.pop %v1514
    %v1516 = vadd.f32 %v1515, 1.0
    %v1517 = vrcp.pop %v1516
    %v1518 = vmul.f32 1.0, %v1517
    %v1519 = vmul.f32 %v1511, %v1406
    %v1520 = vmul.f32 %v1505, %v1512
    %v1521 = vadd.f32 %v1519, %v1520
    %v1522 = vtanh.pop %v1521
    %v1523 = vmul.f32 %v1518, %v1522
    %v1524 = vld [vmem:[#allocation2 + $0x80] sm:$0xff]
    %v1525 = vld [vmem:[#allocation2 + $0x88] sm:$0xff]
    %v1526 = vld [vmem:[#allocation2 + $0x90] sm:$0xff]
    %v1527 = vld [vmem:[#allocation2 + $0x98] sm:$0xff]
    %v1528 = vpack.c.bf16 %v1523, %v1523
    %1529 = vmatprep.subr.bf16.mxu0 %v1121
    %1530 = vmatpush1.bf16.msra.mxu0 %v1120
    %1531 = vmatprep.subr.bf16.mxu0 %v1125
    %1532 = vmatpush1.bf16.msra.mxu0 %v1124
    %1533 = vmatprep.subr.bf16.mxu0 %v1129
    %1534 = vmatpush1.bf16.msra.mxu0 %v1128
    %1535 = vmatprep.subr.bf16.mxu0 %v1133
    %1536 = vmatpush1.bf16.msra.mxu0 %v1132
    %1537 = vmatprep.subr.bf16.mxu0 %v1137
    %1538 = vmatpush1.bf16.msra.mxu0 %v1136
    %1539 = vmatprep.subr.bf16.mxu0 %v1141
    %1540 = vmatpush1.bf16.msra.mxu0 %v1140
    %1541 = vmatprep.subr.bf16.mxu0 %v1145
    %1542 = vmatpush1.bf16.msra.mxu0 %v1144
    %1543 = vmatprep.subr.bf16.mxu0 %v1149
    %1544 = vmatpush1.bf16.msra.mxu0 %v1148
    %1545 = vmatprep.subr.bf16.mxu0 0
    %1546 = vmatpush1.bf16.msra.mxu0 0
    %1547 = vmatprep.subr.bf16.mxu0 0
    %1548 = vmatpush1.bf16.msra.mxu0 0
    %1549 = vmatprep.subr.bf16.mxu0 0
    %1550 = vmatpush1.bf16.msra.mxu0 0
    %1551 = vmatprep.subr.bf16.mxu0 0
    %1552 = vmatpush1.bf16.msra.mxu0 0
    %1553 = vmatprep.subr.bf16.mxu0 0
    %1554 = vmatpush1.bf16.msra.mxu0 0
    %1555 = vmatprep.subr.bf16.mxu0 0
    %1556 = vmatpush1.bf16.msra.mxu0 0
    %1557 = vmatprep.subr.bf16.mxu0 0
    %1558 = vmatpush1.bf16.msra.mxu0 0
    %1559 = vmatprep.subr.bf16.mxu0 0
    %1560 = vmatpush1.bf16.msra.mxu0 0
    %1561 = vmatprep.mubr.bf16.mxu0 0
    %1562 = vmatmul.mubr.bf16.gmra.mrb[0].mxu0 %v1528
    %v1563 = vpop.f32.mrb[0].mxu0
    %v1564 = vadd.f32 0.0, %v1563
    %v1565 = vpop.f32.mrb[0].mxu0
    %v1566 = vadd.f32 0.0, %v1565
    %v1567 = vpop.f32.mrb[0].mxu0
    %v1568 = vpop.f32.mrb[0].mxu0
    %1569 = vdwg.mxu0
    %1570 = vmatprep.subr.bf16.mxu0 %v1123
    %1571 = vmatpush1.bf16.msra.mxu0 %v1122
    %1572 = vmatprep.subr.bf16.mxu0 %v1127
    %1573 = vmatpush1.bf16.msra.mxu0 %v1126
    %1574 = vmatprep.subr.bf16.mxu0 %v1131
    %1575 = vmatpush1.bf16.msra.mxu0 %v1130
    %1576 = vmatprep.subr.bf16.mxu0 %v1135
    %1577 = vmatpush1.bf16.msra.mxu0 %v1134
    %1578 = vmatprep.subr.bf16.mxu0 %v1139
    %1579 = vmatpush1.bf16.msra.mxu0 %v1138
    %1580 = vmatprep.subr.bf16.mxu0 %v1143
    %1581 = vmatpush1.bf16.msra.mxu0 %v1142
    %1582 = vmatprep.subr.bf16.mxu0 %v1147
    %1583 = vmatpush1.bf16.msra.mxu0 %v1146
    %1584 = vmatprep.subr.bf16.mxu0 %v1151
    %1585 = vmatpush1.bf16.msra.mxu0 %v1150
    %1586 = vmatprep.subr.bf16.mxu0 0
    %1587 = vmatpush1.bf16.msra.mxu0 0
    %1588 = vmatprep.subr.bf16.mxu0 0
    %1589 = vmatpush1.bf16.msra.mxu0 0
    %1590 = vmatprep.subr.bf16.mxu0 0
    %1591 = vmatpush1.bf16.msra.mxu0 0
    %1592 = vmatprep.subr.bf16.mxu0 0
    %1593 = vmatpush1.bf16.msra.mxu0 0
    %1594 = vmatprep.subr.bf16.mxu0 0
    %1595 = vmatpush1.bf16.msra.mxu0 0
    %1596 = vmatprep.subr.bf16.mxu0 0
    %1597 = vmatpush1.bf16.msra.mxu0 0
    %1598 = vmatprep.subr.bf16.mxu0 0
    %1599 = vmatpush1.bf16.msra.mxu0 0
    %1600 = vmatprep.subr.bf16.mxu0 0
    %1601 = vmatpush1.bf16.msra.mxu0 0
    %1602 = vmatprep.mubr.bf16.mxu0 0
    %1603 = vmatmul.mubr.bf16.gmra.mrb[0].mxu0 %v1528
    %v1604 = vpop.f32.mrb[0].mxu0
    %v1605 = vadd.f32 0.0, %v1604
    %v1606 = vpop.f32.mrb[0].mxu0
    %v1607 = vadd.f32 0.0, %v1606
    %v1608 = vpop.f32.mrb[0].mxu0
    %v1609 = vpop.f32.mrb[0].mxu0
    %1610 = vdwg.mxu0
    %v1611 = vadd.f32 %v1524, %v1564
    %v1612 = vadd.f32 %v1525, %v1566
    %v1613 = vadd.f32 %v1526, %v1605
    %v1614 = vadd.f32 %v1527, %v1607
    %v1615 = vxor.u32 %v1611, 2147483648
    %v1616 = vmul.f32 %v1615, 1.442695
    %v1617 = vpow.pop %v1616
    %v1618 = vadd.f32 %v1617, 1.0
    %v1619 = vrcp.pop %v1618
    %v1620 = vmul.f32 1.0, %v1619
    %v1621 = vxor.u32 %v1612, 2147483648
    %v1622 = vmul.f32 %v1621, 1.442695
    %v1623 = vpow.pop %v1622
    %v1624 = vadd.f32 %v1623, 1.0
    %v1625 = vrcp.pop %v1624
    %v1626 = vmul.f32 1.0, %v1625
    %v1627 = vtanh.pop %v1613
    %v1628 = vxor.u32 %v1614, 2147483648
    %v1629 = vmul.f32 %v1628, 1.442695
    %v1630 = vpow.pop %v1629
    %v1631 = vadd.f32 %v1630, 1.0
    %v1632 = vrcp.pop %v1631
    %v1633 = vmul.f32 1.0, %v1632
    %v1634 = vmul.f32 %v1626, %v1521
    %v1635 = vmul.f32 %v1620, %v1627
    %v1636 = vadd.f32 %v1634, %v1635
    %v1637 = vtanh.pop %v1636
    %v1638 = vmul.f32 %v1633, %v1637
    %v1639 = vld [vmem:[#allocation2 + $0xa0] sm:$0xff]
    %v1640 = vld [vmem:[#allocation2 + $0xa8] sm:$0xff]
    %v1641 = vld [vmem:[#allocation2 + $0xb0] sm:$0xff]
    %v1642 = vld [vmem:[#allocation2 + $0xb8] sm:$0xff]
    %v1643 = vpack.c.bf16 %v1638, %v1638
    %1644 = vmatprep.subr.bf16.mxu0 %v1121
    %1645 = vmatpush1.bf16.msra.mxu0 %v1120
    %1646 = vmatprep.subr.bf16.mxu0 %v1125
    %1647 = vmatpush1.bf16.msra.mxu0 %v1124
    %1648 = vmatprep.subr.bf16.mxu0 %v1129
    %1649 = vmatpush1.bf16.msra.mxu0 %v1128
    %1650 = vmatprep.subr.bf16.mxu0 %v1133
    %1651 = vmatpush1.bf16.msra.mxu0 %v1132
    %1652 = vmatprep.subr.bf16.mxu0 %v1137
    %1653 = vmatpush1.bf16.msra.mxu0 %v1136
    %1654 = vmatprep.subr.bf16.mxu0 %v1141
    %1655 = vmatpush1.bf16.msra.mxu0 %v1140
    %1656 = vmatprep.subr.bf16.mxu0 %v1145
    %1657 = vmatpush1.bf16.msra.mxu0 %v1144
    %1658 = vmatprep.subr.bf16.mxu0 %v1149
    %1659 = vmatpush1.bf16.msra.mxu0 %v1148
    %1660 = vmatprep.subr.bf16.mxu0 0
    %1661 = vmatpush1.bf16.msra.mxu0 0
    %1662 = vmatprep.subr.bf16.mxu0 0
    %1663 = vmatpush1.bf16.msra.mxu0 0
    %1664 = vmatprep.subr.bf16.mxu0 0
    %1665 = vmatpush1.bf16.msra.mxu0 0
    %1666 = vmatprep.subr.bf16.mxu0 0
    %1667 = vmatpush1.bf16.msra.mxu0 0
    %1668 = vmatprep.subr.bf16.mxu0 0
    %1669 = vmatpush1.bf16.msra.mxu0 0
    %1670 = vmatprep.subr.bf16.mxu0 0
    %1671 = vmatpush1.bf16.msra.mxu0 0
    %1672 = vmatprep.subr.bf16.mxu0 0
    %1673 = vmatpush1.bf16.msra.mxu0 0
    %1674 = vmatprep.subr.bf16.mxu0 0
    %1675 = vmatpush1.bf16.msra.mxu0 0
    %1676 = vmatprep.mubr.bf16.mxu0 0
    %1677 = vmatmul.mubr.bf16.gmra.mrb[0].mxu0 %v1643
    %v1678 = vpop.f32.mrb[0].mxu0
    %v1679 = vadd.f32 0.0, %v1678
    %v1680 = vpop.f32.mrb[0].mxu0
    %v1681 = vadd.f32 0.0, %v1680
    %v1682 = vpop.f32.mrb[0].mxu0
    %v1683 = vpop.f32.mrb[0].mxu0
    %1684 = vdwg.mxu0
    %1685 = vmatprep.subr.bf16.mxu0 %v1123
    %1686 = vmatpush1.bf16.msra.mxu0 %v1122
    %1687 = vmatprep.subr.bf16.mxu0 %v1127
    %1688 = vmatpush1.bf16.msra.mxu0 %v1126
    %1689 = vmatprep.subr.bf16.mxu0 %v1131
    %1690 = vmatpush1.bf16.msra.mxu0 %v1130
    %1691 = vmatprep.subr.bf16.mxu0 %v1135
    %1692 = vmatpush1.bf16.msra.mxu0 %v1134
    %1693 = vmatprep.subr.bf16.mxu0 %v1139
    %1694 = vmatpush1.bf16.msra.mxu0 %v1138
    %1695 = vmatprep.subr.bf16.mxu0 %v1143
    %1696 = vmatpush1.bf16.msra.mxu0 %v1142
    %1697 = vmatprep.subr.bf16.mxu0 %v1147
    %1698 = vmatpush1.bf16.msra.mxu0 %v1146
    %1699 = vmatprep.subr.bf16.mxu0 %v1151
    %1700 = vmatpush1.bf16.msra.mxu0 %v1150
    %1701 = vmatprep.subr.bf16.mxu0 0
    %1702 = vmatpush1.bf16.msra.mxu0 0
    %1703 = vmatprep.subr.bf16.mxu0 0
    %1704 = vmatpush1.bf16.msra.mxu0 0
    %1705 = vmatprep.subr.bf16.mxu0 0
    %1706 = vmatpush1.bf16.msra.mxu0 0
    %1707 = vmatprep.subr.bf16.mxu0 0
    %1708 = vmatpush1.bf16.msra.mxu0 0
    %1709 = vmatprep.subr.bf16.mxu0 0
    %1710 = vmatpush1.bf16.msra.mxu0 0
    %1711 = vmatprep.subr.bf16.mxu0 0
    %1712 = vmatpush1.bf16.msra.mxu0 0
    %1713 = vmatprep.subr.bf16.mxu0 0
    %1714 = vmatpush1.bf16.msra.mxu0 0
    %1715 = vmatprep.subr.bf16.mxu0 0
    %1716 = vmatpush1.bf16.msra.mxu0 0
    %1717 = vmatprep.mubr.bf16.mxu0 0
    %1718 = vmatmul.mubr.bf16.gmra.mrb[0].mxu0 %v1643
    %v1719 = vpop.f32.mrb[0].mxu0
    %v1720 = vadd.f32 0.0, %v1719
    %v1721 = vpop.f32.mrb[0].mxu0
    %v1722 = vadd.f32 0.0, %v1721
    %v1723 = vpop.f32.mrb[0].mxu0
    %v1724 = vpop.f32.mrb[0].mxu0
    %1725 = vdwg.mxu0
    %v1726 = vadd.f32 %v1639, %v1679
    %v1727 = vadd.f32 %v1640, %v1681
    %v1728 = vadd.f32 %v1641, %v1720
    %v1729 = vadd.f32 %v1642, %v1722
    %v1730 = vxor.u32 %v1726, 2147483648
    %v1731 = vmul.f32 %v1730, 1.442695
    %v1732 = vpow.pop %v1731
    %v1733 = vadd.f32 %v1732, 1.0
    %v1734 = vrcp.pop %v1733
    %v1735 = vmul.f32 1.0, %v1734
    %v1736 = vxor.u32 %v1727, 2147483648
    %v1737 = vmul.f32 %v1736, 1.442695
    %v1738 = vpow.pop %v1737
    %v1739 = vadd.f32 %v1738, 1.0
    %v1740 = vrcp.pop %v1739
    %v1741 = vmul.f32 1.0, %v1740
    %v1742 = vtanh.pop %v1728
    %v1743 = vxor.u32 %v1729, 2147483648
    %v1744 = vmul.f32 %v1743, 1.442695
    %v1745 = vpow.pop %v1744
    %v1746 = vadd.f32 %v1745, 1.0
    %v1747 = vrcp.pop %v1746
    %v1748 = vmul.f32 1.0, %v1747
    %v1749 = vmul.f32 %v1741, %v1636
    %v1750 = vmul.f32 %v1735, %v1742
    %v1751 = vadd.f32 %v1749, %v1750
    %v1752 = vtanh.pop %v1751
    %v1753 = vmul.f32 %v1748, %v1752
    %v1754 = vld [vmem:[#allocation2 + $0xc0] sm:$0xff]
    %v1755 = vld [vmem:[#allocation2 + $0xc8] sm:$0xff]
    %v1756 = vld [vmem:[#allocation2 + $0xd0] sm:$0xff]
    %v1757 = vld [vmem:[#allocation2 + $0xd8] sm:$0xff]
    %v1758 = vpack.c.bf16 %v1753, %v1753
    %1759 = vmatprep.subr.bf16.mxu0 %v1121
    %1760 = vmatpush1.bf16.msra.mxu0 %v1120
    %1761 = vmatprep.subr.bf16.mxu0 %v1125
    %1762 = vmatpush1.bf16.msra.mxu0 %v1124
    %1763 = vmatprep.subr.bf16.mxu0 %v1129
    %1764 = vmatpush1.bf16.msra.mxu0 %v1128
    %1765 = vmatprep.subr.bf16.mxu0 %v1133
    %1766 = vmatpush1.bf16.msra.mxu0 %v1132
    %1767 = vmatprep.subr.bf16.mxu0 %v1137
    %1768 = vmatpush1.bf16.msra.mxu0 %v1136
    %1769 = vmatprep.subr.bf16.mxu0 %v1141
    %1770 = vmatpush1.bf16.msra.mxu0 %v1140
    %1771 = vmatprep.subr.bf16.mxu0 %v1145
    %1772 = vmatpush1.bf16.msra.mxu0 %v1144
    %1773 = vmatprep.subr.bf16.mxu0 %v1149
    %1774 = vmatpush1.bf16.msra.mxu0 %v1148
    %1775 = vmatprep.subr.bf16.mxu0 0
    %1776 = vmatpush1.bf16.msra.mxu0 0
    %1777 = vmatprep.subr.bf16.mxu0 0
    %1778 = vmatpush1.bf16.msra.mxu0 0
    %1779 = vmatprep.subr.bf16.mxu0 0
    %1780 = vmatpush1.bf16.msra.mxu0 0
    %1781 = vmatprep.subr.bf16.mxu0 0
    %1782 = vmatpush1.bf16.msra.mxu0 0
    %1783 = vmatprep.subr.bf16.mxu0 0
    %1784 = vmatpush1.bf16.msra.mxu0 0
    %1785 = vmatprep.subr.bf16.mxu0 0
    %1786 = vmatpush1.bf16.msra.mxu0 0
    %1787 = vmatprep.subr.bf16.mxu0 0
    %1788 = vmatpush1.bf16.msra.mxu0 0
    %1789 = vmatprep.subr.bf16.mxu0 0
    %1790 = vmatpush1.bf16.msra.mxu0 0
    %1791 = vmatprep.mubr.bf16.mxu0 0
    %1792 = vmatmul.mubr.bf16.gmra.mrb[0].mxu0 %v1758
    %v1793 = vpop.f32.mrb[0].mxu0
    %v1794 = vadd.f32 0.0, %v1793
    %v1795 = vpop.f32.mrb[0].mxu0
    %v1796 = vadd.f32 0.0, %v1795
    %v1797 = vpop.f32.mrb[0].mxu0
    %v1798 = vpop.f32.mrb[0].mxu0
    %1799 = vdwg.mxu0
    %1800 = vmatprep.subr.bf16.mxu0 %v1123
    %1801 = vmatpush1.bf16.msra.mxu0 %v1122
    %1802 = vmatprep.subr.bf16.mxu0 %v1127
    %1803 = vmatpush1.bf16.msra.mxu0 %v1126
    %1804 = vmatprep.subr.bf16.mxu0 %v1131
    %1805 = vmatpush1.bf16.msra.mxu0 %v1130
    %1806 = vmatprep.subr.bf16.mxu0 %v1135
    %1807 = vmatpush1.bf16.msra.mxu0 %v1134
    %1808 = vmatprep.subr.bf16.mxu0 %v1139
    %1809 = vmatpush1.bf16.msra.mxu0 %v1138
    %1810 = vmatprep.subr.bf16.mxu0 %v1143
    %1811 = vmatpush1.bf16.msra.mxu0 %v1142
    %1812 = vmatprep.subr.bf16.mxu0 %v1147
    %1813 = vmatpush1.bf16.msra.mxu0 %v1146
    %1814 = vmatprep.subr.bf16.mxu0 %v1151
    %1815 = vmatpush1.bf16.msra.mxu0 %v1150
    %1816 = vmatprep.subr.bf16.mxu0 0
    %1817 = vmatpush1.bf16.msra.mxu0 0
    %1818 = vmatprep.subr.bf16.mxu0 0
    %1819 = vmatpush1.bf16.msra.mxu0 0
    %1820 = vmatprep.subr.bf16.mxu0 0
    %1821 = vmatpush1.bf16.msra.mxu0 0
    %1822 = vmatprep.subr.bf16.mxu0 0
    %1823 = vmatpush1.bf16.msra.mxu0 0
    %1824 = vmatprep.subr.bf16.mxu0 0
    %1825 = vmatpush1.bf16.msra.mxu0 0
    %1826 = vmatprep.subr.bf16.mxu0 0
    %1827 = vmatpush1.bf16.msra.mxu0 0
    %1828 = vmatprep.subr.bf16.mxu0 0
    %1829 = vmatpush1.bf16.msra.mxu0 0
    %1830 = vmatprep.subr.bf16.mxu0 0
    %1831 = vmatpush1.bf16.msra.mxu0 0
    %1832 = vmatprep.mubr.bf16.mxu0 0
    %1833 = vmatmul.mubr.bf16.gmra.mrb[0].mxu0 %v1758
    %v1834 = vpop.f32.mrb[0].mxu0
    %v1835 = vadd.f32 0.0, %v1834
    %v1836 = vpop.f32.mrb[0].mxu0
    %v1837 = vadd.f32 0.0, %v1836
    %v1838 = vpop.f32.mrb[0].mxu0
    %v1839 = vpop.f32.mrb[0].mxu0
    %1840 = vdwg.mxu0
    %v1841 = vadd.f32 %v1754, %v1794
    %v1842 = vadd.f32 %v1755, %v1796
    %v1843 = vadd.f32 %v1756, %v1835
    %v1844 = vadd.f32 %v1757, %v1837
    %v1845 = vxor.u32 %v1841, 2147483648
    %v1846 = vmul.f32 %v1845, 1.442695
    %v1847 = vpow.pop %v1846
    %v1848 = vadd.f32 %v1847, 1.0
    %v1849 = vrcp.pop %v1848
    %v1850 = vmul.f32 1.0, %v1849
    %v1851 = vxor.u32 %v1842, 2147483648
    %v1852 = vmul.f32 %v1851, 1.442695
    %v1853 = vpow.pop %v1852
    %v1854 = vadd.f32 %v1853, 1.0
    %v1855 = vrcp.pop %v1854
    %v1856 = vmul.f32 1.0, %v1855
    %v1857 = vtanh.pop %v1843
    %v1858 = vxor.u32 %v1844, 2147483648
    %v1859 = vmul.f32 %v1858, 1.442695
    %v1860 = vpow.pop %v1859
    %v1861 = vadd.f32 %v1860, 1.0
    %v1862 = vrcp.pop %v1861
    %v1863 = vmul.f32 1.0, %v1862
    %v1864 = vmul.f32 %v1856, %v1751
    %v1865 = vmul.f32 %v1850, %v1857
    %v1866 = vadd.f32 %v1864, %v1865
    %v1867 = vtanh.pop %v1866
    %v1868 = vmul.f32 %v1863, %v1867
    %v1869 = vld [vmem:[#allocation2 + $0xe0] sm:$0xff]
    %v1870 = vld [vmem:[#allocation2 + $0xe8] sm:$0xff]
    %v1871 = vld [vmem:[#allocation2 + $0xf0] sm:$0xff]
    %v1872 = vld [vmem:[#allocation2 + $0xf8] sm:$0xff]
    %v1873 = vpack.c.bf16 %v1868, %v1868
    %1874 = vmatprep.subr.bf16.mxu0 %v1121
    %1875 = vmatpush1.bf16.msra.mxu0 %v1120
    %1876 = vmatprep.subr.bf16.mxu0 %v1125
    %1877 = vmatpush1.bf16.msra.mxu0 %v1124
    %1878 = vmatprep.subr.bf16.mxu0 %v1129
    %1879 = vmatpush1.bf16.msra.mxu0 %v1128
    %1880 = vmatprep.subr.bf16.mxu0 %v1133
    %1881 = vmatpush1.bf16.msra.mxu0 %v1132
    %1882 = vmatprep.subr.bf16.mxu0 %v1137
    %1883 = vmatpush1.bf16.msra.mxu0 %v1136
    %1884 = vmatprep.subr.bf16.mxu0 %v1141
    %1885 = vmatpush1.bf16.msra.mxu0 %v1140
    %1886 = vmatprep.subr.bf16.mxu0 %v1145
    %1887 = vmatpush1.bf16.msra.mxu0 %v1144
    %1888 = vmatprep.subr.bf16.mxu0 %v1149
    %1889 = vmatpush1.bf16.msra.mxu0 %v1148
    %1890 = vmatprep.subr.bf16.mxu0 0
    %1891 = vmatpush1.bf16.msra.mxu0 0
    %1892 = vmatprep.subr.bf16.mxu0 0
    %1893 = vmatpush1.bf16.msra.mxu0 0
    %1894 = vmatprep.subr.bf16.mxu0 0
    %1895 = vmatpush1.bf16.msra.mxu0 0
    %1896 = vmatprep.subr.bf16.mxu0 0
    %1897 = vmatpush1.bf16.msra.mxu0 0
    %1898 = vmatprep.subr.bf16.mxu0 0
    %1899 = vmatpush1.bf16.msra.mxu0 0
    %1900 = vmatprep.subr.bf16.mxu0 0
    %1901 = vmatpush1.bf16.msra.mxu0 0
    %1902 = vmatprep.subr.bf16.mxu0 0
    %1903 = vmatpush1.bf16.msra.mxu0 0
    %1904 = vmatprep.subr.bf16.mxu0 0
    %1905 = vmatpush1.bf16.msra.mxu0 0
    %1906 = vmatprep.mubr.bf16.mxu0 0
    %1907 = vmatmul.mubr.bf16.gmra.mrb[0].mxu0 %v1873
    %v1908 = vpop.f32.mrb[0].mxu0
    %v1909 = vadd.f32 0.0, %v1908
    %v1910 = vpop.f32.mrb[0].mxu0
    %v1911 = vadd.f32 0.0, %v1910
    %v1912 = vpop.f32.mrb[0].mxu0
    %v1913 = vpop.f32.mrb[0].mxu0
    %1914 = vdwg.mxu0
    %1915 = vmatprep.subr.bf16.mxu0 %v1123
    %1916 = vmatpush1.bf16.msra.mxu0 %v1122
    %1917 = vmatprep.subr.bf16.mxu0 %v1127
    %1918 = vmatpush1.bf16.msra.mxu0 %v1126
    %1919 = vmatprep.subr.bf16.mxu0 %v1131
    %1920 = vmatpush1.bf16.msra.mxu0 %v1130
    %1921 = vmatprep.subr.bf16.mxu0 %v1135
    %1922 = vmatpush1.bf16.msra.mxu0 %v1134
    %1923 = vmatprep.subr.bf16.mxu0 %v1139
    %1924 = vmatpush1.bf16.msra.mxu0 %v1138
    %1925 = vmatprep.subr.bf16.mxu0 %v1143
    %1926 = vmatpush1.bf16.msra.mxu0 %v1142
    %1927 = vmatprep.subr.bf16.mxu0 %v1147
    %1928 = vmatpush1.bf16.msra.mxu0 %v1146
    %1929 = vmatprep.subr.bf16.mxu0 %v1151
    %1930 = vmatpush1.bf16.msra.mxu0 %v1150
    %1931 = vmatprep.subr.bf16.mxu0 0
    %1932 = vmatpush1.bf16.msra.mxu0 0
    %1933 = vmatprep.subr.bf16.mxu0 0
    %1934 = vmatpush1.bf16.msra.mxu0 0
    %1935 = vmatprep.subr.bf16.mxu0 0
    %1936 = vmatpush1.bf16.msra.mxu0 0
    %1937 = vmatprep.subr.bf16.mxu0 0
    %1938 = vmatpush1.bf16.msra.mxu0 0
    %1939 = vmatprep.subr.bf16.mxu0 0
    %1940 = vmatpush1.bf16.msra.mxu0 0
    %1941 = vmatprep.subr.bf16.mxu0 0
    %1942 = vmatpush1.bf16.msra.mxu0 0
    %1943 = vmatprep.subr.bf16.mxu0 0
    %1944 = vmatpush1.bf16.msra.mxu0 0
    %1945 = vmatprep.subr.bf16.mxu0 0
    %1946 = vmatpush1.bf16.msra.mxu0 0
    %1947 = vmatprep.mubr.bf16.mxu0 0
    %1948 = vmatmul.mubr.bf16.gmra.mrb[0].mxu0 %v1873
    %v1949 = vpop.f32.mrb[0].mxu0
    %v1950 = vadd.f32 0.0, %v1949
    %v1951 = vpop.f32.mrb[0].mxu0
    %v1952 = vadd.f32 0.0, %v1951
    %v1953 = vpop.f32.mrb[0].mxu0
    %v1954 = vpop.f32.mrb[0].mxu0
    %1955 = vdwg.mxu0
    %v1956 = vadd.f32 %v1869, %v1909
    %v1957 = vadd.f32 %v1870, %v1911
    %v1958 = vadd.f32 %v1871, %v1950
    %v1959 = vadd.f32 %v1872, %v1952
    %v1960 = vxor.u32 %v1956, 2147483648
    %v1961 = vmul.f32 %v1960, 1.442695
    %v1962 = vpow.pop %v1961
    %v1963 = vadd.f32 %v1962, 1.0
    %v1964 = vrcp.pop %v1963
    %v1965 = vmul.f32 1.0, %v1964
    %v1966 = vxor.u32 %v1957, 2147483648
    %v1967 = vmul.f32 %v1966, 1.442695
    %v1968 = vpow.pop %v1967
    %v1969 = vadd.f32 %v1968, 1.0
    %v1970 = vrcp.pop %v1969
    %v1971 = vmul.f32 1.0, %v1970
    %v1972 = vtanh.pop %v1958
    %v1973 = vxor.u32 %v1959, 2147483648
    %v1974 = vmul.f32 %v1973, 1.442695
    %v1975 = vpow.pop %v1974
    %v1976 = vadd.f32 %v1975, 1.0
    %v1977 = vrcp.pop %v1976
    %v1978 = vmul.f32 1.0, %v1977
    %v1979 = vmul.f32 %v1971, %v1866
    %v1980 = vmul.f32 %v1965, %v1972
    %v1981 = vadd.f32 %v1979, %v1980
    %v1982 = vtanh.pop %v1981
    %v1983 = vmul.f32 %v1978, %v1982
    %v1984 = vmax.f32 %v1983, 0.0
    %v1985 = vpack.c.bf16 %v584, %v584
    %v1986 = vpack.c.bf16 %v1984, %v1984
    %v1987 = vld [vmem:[#allocation9] sm:$0xf]
    %v1988 = vld [vmem:[#allocation9 + $0x4] sm:$0xf]
    %v1989 = vld [vmem:[#allocation9 + $0x8] sm:$0xf]
    %v1990 = vld [vmem:[#allocation9 + $0xc] sm:$0xf]
    %v1991 = vld [vmem:[#allocation9 + $0x10] sm:$0xf]
    %v1992 = vld [vmem:[#allocation9 + $0x14] sm:$0xf]
    %v1993 = vld [vmem:[#allocation9 + $0x18] sm:$0xf]
    %v1994 = vld [vmem:[#allocation9 + $0x1c] sm:$0xf]
    %v1995 = vld [vmem:[#allocation9 + $0x20] sm:$0xf]
    %v1996 = vld [vmem:[#allocation9 + $0x24] sm:$0xf]
    %v1997 = vld [vmem:[#allocation9 + $0x28] sm:$0xf]
    %v1998 = vld [vmem:[#allocation9 + $0x2c] sm:$0xf]
    %v1999 = vld [vmem:[#allocation9 + $0x30] sm:$0xf]
    %v2000 = vld [vmem:[#allocation9 + $0x34] sm:$0xf]
    %v2001 = vld [vmem:[#allocation9 + $0x38] sm:$0xf]
    %v2002 = vld [vmem:[#allocation9 + $0x3c] sm:$0xf]
    %v2003 = vld [vmem:[#allocation9 + $0x40] sm:$0xf]
    %v2004 = vld [vmem:[#allocation9 + $0x44] sm:$0xf]
    %v2005 = vld [vmem:[#allocation9 + $0x48] sm:$0xf]
    %v2006 = vld [vmem:[#allocation9 + $0x4c] sm:$0xf]
    %v2007 = vld [vmem:[#allocation9 + $0x50] sm:$0xf]
    %v2008 = vld [vmem:[#allocation9 + $0x54] sm:$0xf]
    %v2009 = vld [vmem:[#allocation9 + $0x58] sm:$0xf]
    %v2010 = vld [vmem:[#allocation9 + $0x5c] sm:$0xf]
    %v2011 = vld [vmem:[#allocation9 + $0x60] sm:$0xf]
    %v2012 = vld [vmem:[#allocation9 + $0x64] sm:$0xf]
    %v2013 = vld [vmem:[#allocation9 + $0x68] sm:$0xf]
    %v2014 = vld [vmem:[#allocation9 + $0x6c] sm:$0xf]
    %v2015 = vld [vmem:[#allocation9 + $0x70] sm:$0xf]
    %v2016 = vld [vmem:[#allocation9 + $0x74] sm:$0xf]
    %v2017 = vld [vmem:[#allocation9 + $0x78] sm:$0xf]
    %v2018 = vld [vmem:[#allocation9 + $0x7c] sm:$0xf]
    %s2019 = scalar_lea.vmem [#allocation12], 24
    %v2020 = vld [vmem:[%s2019] sm:$0xff]
    %v2053 = vunpack.c.l.b16 %v1987
    %v2054 = vunpack.c.l.b16 %v1988
    %v2055 = vunpack.c.l.b16 %v1989
    %v2056 = vunpack.c.l.b16 %v1990
    %v2057 = vunpack.c.l.b16 %v1991
    %v2058 = vunpack.c.l.b16 %v1992
    %v2059 = vunpack.c.l.b16 %v1993
    %v2060 = vunpack.c.l.b16 %v1994
    %v2061 = vunpack.c.l.b16 %v1995
    %v2062 = vunpack.c.l.b16 %v1996
    %v2063 = vunpack.c.l.b16 %v1997
    %v2064 = vunpack.c.l.b16 %v1998
    %v2065 = vunpack.c.l.b16 %v1999
    %v2066 = vunpack.c.l.b16 %v2000
    %v2067 = vunpack.c.l.b16 %v2001
    %v2068 = vunpack.c.l.b16 %v2002
    %v2069 = vunpack.c.l.b16 %v2003
    %v2070 = vunpack.c.l.b16 %v2004
    %v2071 = vunpack.c.l.b16 %v2005
    %v2072 = vunpack.c.l.b16 %v2006
    %v2073 = vunpack.c.l.b16 %v2007
    %v2074 = vunpack.c.l.b16 %v2008
    %v2075 = vunpack.c.l.b16 %v2009
    %v2076 = vunpack.c.l.b16 %v2010
    %v2077 = vunpack.c.l.b16 %v2011
    %v2078 = vunpack.c.l.b16 %v2012
    %v2079 = vunpack.c.l.b16 %v2013
    %v2080 = vunpack.c.l.b16 %v2014
    %v2081 = vunpack.c.l.b16 %v2015
    %v2082 = vunpack.c.l.b16 %v2016
    %v2083 = vunpack.c.l.b16 %v2017
    %v2084 = vunpack.c.l.b16 %v2018
    %v2085 = vpack.c.b16 %v2054, %v2053
    %v2086 = vpack.c.b16 %v2056, %v2055
    %v2087 = vpack.c.b16 %v2058, %v2057
    %v2088 = vpack.c.b16 %v2060, %v2059
    %v2089 = vpack.c.b16 %v2062, %v2061
    %v2090 = vpack.c.b16 %v2064, %v2063
    %v2091 = vpack.c.b16 %v2066, %v2065
    %v2092 = vpack.c.b16 %v2068, %v2067
    %v2093 = vpack.c.b16 %v2070, %v2069
    %v2094 = vpack.c.b16 %v2072, %v2071
    %v2095 = vpack.c.b16 %v2074, %v2073
    %v2096 = vpack.c.b16 %v2076, %v2075
    %v2097 = vpack.c.b16 %v2078, %v2077
    %v2098 = vpack.c.b16 %v2080, %v2079
    %v2099 = vpack.c.b16 %v2082, %v2081
    %v2100 = vpack.c.b16 %v2084, %v2083
    %2117 = vmatprep.subr.bf16.mxu0 0
    %2118 = vmatpush1.bf16.msra.mxu0 %v2085
    %2119 = vmatprep.subr.bf16.mxu0 0
    %2120 = vmatpush1.bf16.msra.mxu0 %v2086
    %2121 = vmatprep.subr.bf16.mxu0 0
    %2122 = vmatpush1.bf16.msra.mxu0 %v2087
    %2123 = vmatprep.subr.bf16.mxu0 0
    %2124 = vmatpush1.bf16.msra.mxu0 %v2088
    %2125 = vmatprep.subr.bf16.mxu0 0
    %2126 = vmatpush1.bf16.msra.mxu0 %v2089
    %2127 = vmatprep.subr.bf16.mxu0 0
    %2128 = vmatpush1.bf16.msra.mxu0 %v2090
    %2129 = vmatprep.subr.bf16.mxu0 0
    %2130 = vmatpush1.bf16.msra.mxu0 %v2091
    %2131 = vmatprep.subr.bf16.mxu0 0
    %2132 = vmatpush1.bf16.msra.mxu0 %v2092
    %2133 = vmatprep.subr.bf16.mxu0 0
    %2134 = vmatpush1.bf16.msra.mxu0 %v2093
    %2135 = vmatprep.subr.bf16.mxu0 0
    %2136 = vmatpush1.bf16.msra.mxu0 %v2094
    %2137 = vmatprep.subr.bf16.mxu0 0
    %2138 = vmatpush1.bf16.msra.mxu0 %v2095
    %2139 = vmatprep.subr.bf16.mxu0 0
    %2140 = vmatpush1.bf16.msra.mxu0 %v2096
    %2141 = vmatprep.subr.bf16.mxu0 0
    %2142 = vmatpush1.bf16.msra.mxu0 %v2097
    %2143 = vmatprep.subr.bf16.mxu0 0
    %2144 = vmatpush1.bf16.msra.mxu0 %v2098
    %2145 = vmatprep.subr.bf16.mxu0 0
    %2146 = vmatpush1.bf16.msra.mxu0 %v2099
    %2147 = vmatprep.subr.bf16.mxu0 0
    %2148 = vmatpush1.bf16.msra.mxu0 %v2100
    %2149 = vmatprep.mubr.bf16.mxu0 %v1986
    %2150 = vmatmul.mubr.bf16.gmra.mrb[0].mxu0 %v1985
    %v2151 = vpop.f32.mrb[0].mxu0
    %v2152 = vadd.f32 %v2020, %v2151
    %v2153 = vpop.f32.mrb[0].mxu0
    %v2154 = vpop.f32.mrb[0].mxu0
    %v2155 = vpop.f32.mrb[0].mxu0
    %2156 = vdwg.mxu0
    %v2157 = vtanh.pop %v2152
    %v2158 = vpack.c.bf16 %v2157, %v2157
    %s2159 = scalar_lea.vmem [#allocation6], 192
    %v2160 = vld [vmem:[%s2159] sm:$0xf]
    %v2161 = vld [vmem:[%s2159 + $0x4] sm:$0xf]
    %v2162 = vld [vmem:[%s2159 + $0x8] sm:$0xf]
    %v2163 = vld [vmem:[%s2159 + $0xc] sm:$0xf]
    %v2164 = vld [vmem:[%s2159 + $0x10] sm:$0xf]
    %v2165 = vld [vmem:[%s2159 + $0x14] sm:$0xf]
    %v2166 = vld [vmem:[%s2159 + $0x18] sm:$0xf]
    %v2167 = vld [vmem:[%s2159 + $0x1c] sm:$0xf]
    %v2168 = vld [vmem:[%s2159 + $0x20] sm:$0xf]
    %v2169 = vld [vmem:[%s2159 + $0x24] sm:$0xf]
    %v2170 = vld [vmem:[%s2159 + $0x28] sm:$0xf]
    %v2171 = vld [vmem:[%s2159 + $0x2c] sm:$0xf]
    %v2172 = vld [vmem:[%s2159 + $0x30] sm:$0xf]
    %v2173 = vld [vmem:[%s2159 + $0x34] sm:$0xf]
    %v2174 = vld [vmem:[%s2159 + $0x38] sm:$0xf]
    %v2175 = vld [vmem:[%s2159 + $0x3c] sm:$0xf]
    %s2176 = scalar_lea.vmem [#allocation12], 32
    %v2177 = vld [vmem:[%s2176] sm:$0xff]
    %v2194 = vunpack.c.l.b16 %v2160
    %v2195 = vunpack.c.l.b16 %v2161
    %v2196 = vunpack.c.l.b16 %v2162
    %v2197 = vunpack.c.l.b16 %v2163
    %v2198 = vunpack.c.l.b16 %v2164
    %v2199 = vunpack.c.l.b16 %v2165
    %v2200 = vunpack.c.l.b16 %v2166
    %v2201 = vunpack.c.l.b16 %v2167
    %v2202 = vunpack.c.l.b16 %v2168
    %v2203 = vunpack.c.l.b16 %v2169
    %v2204 = vunpack.c.l.b16 %v2170
    %v2205 = vunpack.c.l.b16 %v2171
    %v2206 = vunpack.c.l.b16 %v2172
    %v2207 = vunpack.c.l.b16 %v2173
    %v2208 = vunpack.c.l.b16 %v2174
    %v2209 = vunpack.c.l.b16 %v2175
    %v2210 = vpack.c.b16 %v2195, %v2194
    %v2211 = vpack.c.b16 %v2197, %v2196
    %v2212 = vpack.c.b16 %v2199, %v2198
    %v2213 = vpack.c.b16 %v2201, %v2200
    %v2214 = vpack.c.b16 %v2203, %v2202
    %v2215 = vpack.c.b16 %v2205, %v2204
    %v2216 = vpack.c.b16 %v2207, %v2206
    %v2217 = vpack.c.b16 %v2209, %v2208
    %2226 = vmatprep.subr.bf16.mxu0 0
    %2227 = vmatpush1.bf16.msra.mxu0 %v2210
    %2228 = vmatprep.subr.bf16.mxu0 0
    %2229 = vmatpush1.bf16.msra.mxu0 %v2211
    %2230 = vmatprep.subr.bf16.mxu0 0
    %2231 = vmatpush1.bf16.msra.mxu0 %v2212
    %2232 = vmatprep.subr.bf16.mxu0 0
    %2233 = vmatpush1.bf16.msra.mxu0 %v2213
    %2234 = vmatprep.subr.bf16.mxu0 0
    %2235 = vmatpush1.bf16.msra.mxu0 %v2214
    %2236 = vmatprep.subr.bf16.mxu0 0
    %2237 = vmatpush1.bf16.msra.mxu0 %v2215
    %2238 = vmatprep.subr.bf16.mxu0 0
    %2239 = vmatpush1.bf16.msra.mxu0 %v2216
    %2240 = vmatprep.subr.bf16.mxu0 0
    %2241 = vmatpush1.bf16.msra.mxu0 %v2217
    %2242 = vmatprep.subr.bf16.mxu0 0
    %2243 = vmatpush1.bf16.msra.mxu0 0
    %2244 = vmatprep.subr.bf16.mxu0 0
    %2245 = vmatpush1.bf16.msra.mxu0 0
    %2246 = vmatprep.subr.bf16.mxu0 0
    %2247 = vmatpush1.bf16.msra.mxu0 0
    %2248 = vmatprep.subr.bf16.mxu0 0
    %2249 = vmatpush1.bf16.msra.mxu0 0
    %2250 = vmatprep.subr.bf16.mxu0 0
    %2251 = vmatpush1.bf16.msra.mxu0 0
    %2252 = vmatprep.subr.bf16.mxu0 0
    %2253 = vmatpush1.bf16.msra.mxu0 0
    %2254 = vmatprep.subr.bf16.mxu0 0
    %2255 = vmatpush1.bf16.msra.mxu0 0
    %2256 = vmatprep.subr.bf16.mxu0 0
    %2257 = vmatpush1.bf16.msra.mxu0 0
    %2258 = vmatprep.mubr.bf16.mxu0 0
    %2259 = vmatmul.mubr.bf16.gmra.mrb[0].mxu0 %v2158
    %v2260 = vpop.f32.mrb[0].mxu0
    %v2261 = vadd.f32 %v2177, %v2260
    %v2262 = vpop.f32.mrb[0].mxu0
    %v2263 = vpop.f32.mrb[0].mxu0
    %v2264 = vpop.f32.mrb[0].mxu0
    %2265 = vdwg.mxu0
    %v2266 = vtanh.pop %v2261
    %v2267 = vpack.c.bf16 %v2266, %v2266
    %s2268 = scalar_lea.vmem [#allocation6], 256
    %v2269 = vld [vmem:[%s2268] sm:$0xf]
    %v2270 = vld [vmem:[%s2268 + $0x4] sm:$0xf]
    %v2271 = vld [vmem:[%s2268 + $0x8] sm:$0xf]
    %v2272 = vld [vmem:[%s2268 + $0xc] sm:$0xf]
    %v2273 = vld [vmem:[%s2268 + $0x10] sm:$0xf]
    %v2274 = vld [vmem:[%s2268 + $0x14] sm:$0xf]
    %v2275 = vld [vmem:[%s2268 + $0x18] sm:$0xf]
    %v2276 = vld [vmem:[%s2268 + $0x1c] sm:$0xf]
    %v2277 = vld [vmem:[%s2268 + $0x20] sm:$0xf]
    %v2278 = vld [vmem:[%s2268 + $0x24] sm:$0xf]
    %v2279 = vld [vmem:[%s2268 + $0x28] sm:$0xf]
    %v2280 = vld [vmem:[%s2268 + $0x2c] sm:$0xf]
    %v2281 = vld [vmem:[%s2268 + $0x30] sm:$0xf]
    %v2282 = vld [vmem:[%s2268 + $0x34] sm:$0xf]
    %v2283 = vld [vmem:[%s2268 + $0x38] sm:$0xf]
    %v2284 = vld [vmem:[%s2268 + $0x3c] sm:$0xf]
    %s2285 = scalar_lea.vmem [#allocation12], 40
    %v2286 = vld [vmem:[%s2285] sm:$0xff]
    %v2303 = vunpack.c.l.b16 %v2269
    %v2304 = vunpack.c.l.b16 %v2270
    %v2305 = vunpack.c.l.b16 %v2271
    %v2306 = vunpack.c.l.b16 %v2272
    %v2307 = vunpack.c.l.b16 %v2273
    %v2308 = vunpack.c.l.b16 %v2274
    %v2309 = vunpack.c.l.b16 %v2275
    %v2310 = vunpack.c.l.b16 %v2276
    %v2311 = vunpack.c.l.b16 %v2277
    %v2312 = vunpack.c.l.b16 %v2278
    %v2313 = vunpack.c.l.b16 %v2279
    %v2314 = vunpack.c.l.b16 %v2280
    %v2315 = vunpack.c.l.b16 %v2281
    %v2316 = vunpack.c.l.b16 %v2282
    %v2317 = vunpack.c.l.b16 %v2283
    %v2318 = vunpack.c.l.b16 %v2284
    %v2319 = vpack.c.b16 %v2304, %v2303
    %v2320 = vpack.c.b16 %v2306, %v2305
    %v2321 = vpack.c.b16 %v2308, %v2307
    %v2322 = vpack.c.b16 %v2310, %v2309
    %v2323 = vpack.c.b16 %v2312, %v2311
    %v2324 = vpack.c.b16 %v2314, %v2313
    %v2325 = vpack.c.b16 %v2316, %v2315
    %v2326 = vpack.c.b16 %v2318, %v2317
    %2335 = vmatprep.subr.bf16.mxu0 0
    %2336 = vmatpush1.bf16.msra.mxu0 %v2319
    %2337 = vmatprep.subr.bf16.mxu0 0
    %2338 = vmatpush1.bf16.msra.mxu0 %v2320
    %2339 = vmatprep.subr.bf16.mxu0 0
    %2340 = vmatpush1.bf16.msra.mxu0 %v2321
    %2341 = vmatprep.subr.bf16.mxu0 0
    %2342 = vmatpush1.bf16.msra.mxu0 %v2322
    %2343 = vmatprep.subr.bf16.mxu0 0
    %2344 = vmatpush1.bf16.msra.mxu0 %v2323
    %2345 = vmatprep.subr.bf16.mxu0 0
    %2346 = vmatpush1.bf16.msra.mxu0 %v2324
    %2347 = vmatprep.subr.bf16.mxu0 0
    %2348 = vmatpush1.bf16.msra.mxu0 %v2325
    %2349 = vmatprep.subr.bf16.mxu0 0
    %2350 = vmatpush1.bf16.msra.mxu0 %v2326
    %2351 = vmatprep.subr.bf16.mxu0 0
    %2352 = vmatpush1.bf16.msra.mxu0 0
    %2353 = vmatprep.subr.bf16.mxu0 0
    %2354 = vmatpush1.bf16.msra.mxu0 0
    %2355 = vmatprep.subr.bf16.mxu0 0
    %2356 = vmatpush1.bf16.msra.mxu0 0
    %2357 = vmatprep.subr.bf16.mxu0 0
    %2358 = vmatpush1.bf16.msra.mxu0 0
    %2359 = vmatprep.subr.bf16.mxu0 0
    %2360 = vmatpush1.bf16.msra.mxu0 0
    %2361 = vmatprep.subr.bf16.mxu0 0
    %2362 = vmatpush1.bf16.msra.mxu0 0
    %2363 = vmatprep.subr.bf16.mxu0 0
    %2364 = vmatpush1.bf16.msra.mxu0 0
    %2365 = vmatprep.subr.bf16.mxu0 0
    %2366 = vmatpush1.bf16.msra.mxu0 0
    %2367 = vmatprep.mubr.bf16.mxu0 0
    %2368 = vmatmul.mubr.bf16.gmra.mrb[0].mxu0 %v2267
    %v2369 = vpop.f32.mrb[0].mxu0
    %v2370 = vadd.f32 %v2286, %v2369
    %v2371 = vpop.f32.mrb[0].mxu0
    %v2372 = vpop.f32.mrb[0].mxu0
    %v2373 = vpop.f32.mrb[0].mxu0
    %2374 = vdwg.mxu0
    %v2375 = vtanh.pop %v2370
    %v2376 = vpack.c.bf16 %v2375, %v2375
    %s2377 = scalar_lea.vmem [#allocation6], 320
    %v2378 = vld [vmem:[%s2377] sm:$0xf]
    %v2379 = vld [vmem:[%s2377 + $0x4] sm:$0xf]
    %v2380 = vld [vmem:[%s2377 + $0x8] sm:$0xf]
    %v2381 = vld [vmem:[%s2377 + $0xc] sm:$0xf]
    %v2382 = vld [vmem:[%s2377 + $0x10] sm:$0xf]
    %v2383 = vld [vmem:[%s2377 + $0x14] sm:$0xf]
    %v2384 = vld [vmem:[%s2377 + $0x18] sm:$0xf]
    %v2385 = vld [vmem:[%s2377 + $0x1c] sm:$0xf]
    %v2386 = vld [vmem:[%s2377 + $0x20] sm:$0xf]
    %v2387 = vld [vmem:[%s2377 + $0x24] sm:$0xf]
    %v2388 = vld [vmem:[%s2377 + $0x28] sm:$0xf]
    %v2389 = vld [vmem:[%s2377 + $0x2c] sm:$0xf]
    %v2390 = vld [vmem:[%s2377 + $0x30] sm:$0xf]
    %v2391 = vld [vmem:[%s2377 + $0x34] sm:$0xf]
    %v2392 = vld [vmem:[%s2377 + $0x38] sm:$0xf]
    %v2393 = vld [vmem:[%s2377 + $0x3c] sm:$0xf]
    %s2394 = scalar_lea.vmem [#allocation12], 48
    %v2395 = vld [vmem:[%s2394] sm:$0xff]
    %v2412 = vunpack.c.l.b16 %v2378
    %v2413 = vunpack.c.l.b16 %v2379
    %v2414 = vunpack.c.l.b16 %v2380
    %v2415 = vunpack.c.l.b16 %v2381
    %v2416 = vunpack.c.l.b16 %v2382
    %v2417 = vunpack.c.l.b16 %v2383
    %v2418 = vunpack.c.l.b16 %v2384
    %v2419 = vunpack.c.l.b16 %v2385
    %v2420 = vunpack.c.l.b16 %v2386
    %v2421 = vunpack.c.l.b16 %v2387
    %v2422 = vunpack.c.l.b16 %v2388
    %v2423 = vunpack.c.l.b16 %v2389
    %v2424 = vunpack.c.l.b16 %v2390
    %v2425 = vunpack.c.l.b16 %v2391
    %v2426 = vunpack.c.l.b16 %v2392
    %v2427 = vunpack.c.l.b16 %v2393
    %v2428 = vpack.c.b16 %v2413, %v2412
    %v2429 = vpack.c.b16 %v2415, %v2414
    %v2430 = vpack.c.b16 %v2417, %v2416
    %v2431 = vpack.c.b16 %v2419, %v2418
    %v2432 = vpack.c.b16 %v2421, %v2420
    %v2433 = vpack.c.b16 %v2423, %v2422
    %v2434 = vpack.c.b16 %v2425, %v2424
    %v2435 = vpack.c.b16 %v2427, %v2426
    %2444 = vmatprep.subr.bf16.mxu0 0
    %2445 = vmatpush1.bf16.msra.mxu0 %v2428
    %2446 = vmatprep.subr.bf16.mxu0 0
    %2447 = vmatpush1.bf16.msra.mxu0 %v2429
    %2448 = vmatprep.subr.bf16.mxu0 0
    %2449 = vmatpush1.bf16.msra.mxu0 %v2430
    %2450 = vmatprep.subr.bf16.mxu0 0
    %2451 = vmatpush1.bf16.msra.mxu0 %v2431
    %2452 = vmatprep.subr.bf16.mxu0 0
    %2453 = vmatpush1.bf16.msra.mxu0 %v2432
    %2454 = vmatprep.subr.bf16.mxu0 0
    %2455 = vmatpush1.bf16.msra.mxu0 %v2433
    %2456 = vmatprep.subr.bf16.mxu0 0
    %2457 = vmatpush1.bf16.msra.mxu0 %v2434
    %2458 = vmatprep.subr.bf16.mxu0 0
    %2459 = vmatpush1.bf16.msra.mxu0 %v2435
    %2460 = vmatprep.subr.bf16.mxu0 0
    %2461 = vmatpush1.bf16.msra.mxu0 0
    %2462 = vmatprep.subr.bf16.mxu0 0
    %2463 = vmatpush1.bf16.msra.mxu0 0
    %2464 = vmatprep.subr.bf16.mxu0 0
    %2465 = vmatpush1.bf16.msra.mxu0 0
    %2466 = vmatprep.subr.bf16.mxu0 0
    %2467 = vmatpush1.bf16.msra.mxu0 0
    %2468 = vmatprep.subr.bf16.mxu0 0
    %2469 = vmatpush1.bf16.msra.mxu0 0
    %2470 = vmatprep.subr.bf16.mxu0 0
    %2471 = vmatpush1.bf16.msra.mxu0 0
    %2472 = vmatprep.subr.bf16.mxu0 0
    %2473 = vmatpush1.bf16.msra.mxu0 0
    %2474 = vmatprep.subr.bf16.mxu0 0
    %2475 = vmatpush1.bf16.msra.mxu0 0
    %2476 = vmatprep.mubr.bf16.mxu0 0
    %2477 = vmatmul.mubr.bf16.gmra.mrb[0].mxu0 %v2376
    %v2478 = vpop.f32.mrb[0].mxu0
    %v2479 = vadd.f32 %v2395, %v2478
    %v2480 = vpop.f32.mrb[0].mxu0
    %v2481 = vpop.f32.mrb[0].mxu0
    %v2482 = vpop.f32.mrb[0].mxu0
    %2483 = vdwg.mxu0
    %2484 = vst [vmem:[#allocation14] sm:$0xff] %v2479
    // Predicated region
    $region54: #{tpu_custom_call.1} parent=1 // pred_check
      _
    $region55: #{tpu_custom_call.1} parent=1 // pred_check_branch
      %2486 = sbr.rel (0) target = $region57
    $region56: #{tpu_custom_call.1} parent=1 // pred_region
      %s2488 = ssub.s32 384, 384
      %2489 = vsyncadd [#allocation5], %s2488
      %s2490 = sshll.u32 [#allocation14], 4
      %s2491 = int_to_ptr.vmem [resolvable:$true] %s2490
      %2496 = dma.vmem_to_hbm [thread:$0]  %s2491, 384, %s7, [#allocation5], 128, 128, 8
    $region57: #{tpu_custom_call.1} parent=1 // pred_fallthru
      _
    // Predicated region
    $region58: #{tpu_custom_call.1} parent=1 // pred_check
      _
    $region59: #{tpu_custom_call.1} parent=1 // pred_check_branch
      %2498 = sbr.rel (0) target = $region61
    $region60: #{tpu_custom_call.1} parent=1 // pred_region
      %2499 = dma.done [#allocation5], 384
    $region61: #{tpu_custom_call.1} parent=1 // pred_fallthru
      _
    %2500 = vsyncpa [#allocation4], 1
    %2501 = vsyncpa [#allocation7], 1
    %2502 = vsyncpa [#allocation10], 1
    %2503 = vsyncpa [#allocation13], 1
    %2504 = vsyncpa [#allocation5], 1

</llo_original>
